<compile_context>
chip_gen: v5e
topology: v5e:2x2
jax: 0.10.0
libtpu: 0.0.40
codegen_flags: <defaults>
</compile_context>

<pallas_src>
import jax
import jax.numpy as jnp
from jax.experimental import pallas as pl
from jax.experimental.pallas import tpu as pltpu

HIDDEN_DIM = 32
INPUT_DIM = 1
NUM_LAYERS = 2
OUTPUT_DIM = 1

LANE = 128
GATE_DIM = 3 * HIDDEN_DIM                              # 96
GATE_PAD = ((GATE_DIM + LANE - 1) // LANE) * LANE      # 128 (lane-dense gate slab)
OUT_PAD = ((OUTPUT_DIM + LANE - 1) // LANE) * LANE     # 128 (lane-dense fc output)


def gru_kernel(x_ref,
               wih0_ref, whh0_ref, b0_ref, bhhn0_ref,
               wih1_ref, whh1_ref, b1_ref, bhhn1_ref,
               fcw_ref, fcb_ref,
               out_ref,
               gi_ref, seq_ref):
    # Layouts (all f32, all VMEM):
    #   x_ref   : (T*B, I)           time-major, flattened over (t, b)
    #   wihL    : (I_or_H, GATE_PAD) torch weight_ih_lL.T, zero-padded 96->128 lanes
    #   whhL    : (H, GATE_PAD)      torch weight_hh_lL.T, zero-padded
    #   bL      : (1, GATE_PAD)      folded bias [bih_r+bhh_r, bih_z+bhh_z, bih_n, 0...]
    #   bhhnL   : (1, H)             bhh_n (needed inside r*(gh_n + bhh_n))
    #   fcw     : (H, OUT_PAD)       fc.weight.T zero-padded ; fcb : (1, OUT_PAD)
    #   out_ref : (B, OUT_PAD)       wrapper slices [:, :OUTPUT_DIM]
    #   gi_ref  : (T*B, GATE_PAD)    scratch: hoisted input projections (flat, no reshape)
    #   seq_ref : (T*B, H)           scratch: layer-0 output sequence (flat, no reshape)
    B = out_ref.shape[0]
    H = whh0_ref.shape[0]
    TB, GP = gi_ref.shape
    T = TB // B

    def run_layer(whh_ref, bhhn_ref, write_seq):
        whh = whh_ref[...]                                    # (H, GP), stays in vregs
        bhhn = jnp.broadcast_to(bhhn_ref[...], (B, H))        # hoist broadcast out of the loop
        h = jnp.zeros((B, H), jnp.float32)                    # h carried in vregs (no VMEM RT)
        # T is small & static: full unroll -> cross-step MXU/EUP/VPU interleave.
        for t in range(T):
            gi_t = gi_ref[t * B:(t + 1) * B, :]               # (B, GP); independent of h
            gh = jnp.dot(h, whh, preferred_element_type=jnp.float32)   # single MXU op / step
            r = jax.nn.sigmoid(gi_t[:, 0:H] + gh[:, 0:H])
            z = jax.nn.sigmoid(gi_t[:, H:2 * H] + gh[:, H:2 * H])
            n = jnp.tanh(gi_t[:, 2 * H:3 * H] + r * (gh[:, 2 * H:3 * H] + bhhn))
            h = n + z * (h - n)                               # == (1-z)*n + z*h
            if write_seq:
                seq_ref[t * B:(t + 1) * B, :] = h             # off the recurrence crit path
        return h

    # ---- layer 0: hoisted input projection (one op for all T timesteps) ----
    if x_ref.shape[-1] == 1:
        # INPUT_DIM == 1: outer product -> cheap VPU broadcast multiply (skip degenerate MXU K=1).
        gi_ref[...] = x_ref[...] * wih0_ref[...] + b0_ref[...]
    else:
        gi_ref[...] = (jnp.dot(x_ref[...], wih0_ref[...],
                               preferred_element_type=jnp.float32) + b0_ref[...])
    run_layer(whh0_ref, bhhn0_ref, write_seq=True)

    # ---- layer 1: hoisted input projection over the whole layer-0 sequence ----
    gi_ref[...] = (jnp.dot(seq_ref[...], wih1_ref[...],
                           preferred_element_type=jnp.float32) + b1_ref[...])
    h_last = run_layer(whh1_ref, bhhn1_ref, write_seq=False)

    # ---- final linear on the last hidden state (lane-dense padded output) ----
    out_ref[...] = (jnp.dot(h_last, fcw_ref[...],
                            preferred_element_type=jnp.float32) + fcb_ref[...])


def init_params(key):
    """Deterministic init matching PyTorch shapes (uniform(-1/sqrt(H), 1/sqrt(H)))."""
    k = 1.0 / jnp.sqrt(jnp.float32(HIDDEN_DIM))
    params = {"layers": [], "fc_w": None, "fc_b": None}
    keys = jax.random.split(key, NUM_LAYERS * 4 + 2)
    idx = 0
    for layer in range(NUM_LAYERS):
        in_dim = INPUT_DIM if layer == 0 else HIDDEN_DIM
        wih = jax.random.uniform(keys[idx], (3 * HIDDEN_DIM, in_dim), jnp.float32, -k, k); idx += 1
        whh = jax.random.uniform(keys[idx], (3 * HIDDEN_DIM, HIDDEN_DIM), jnp.float32, -k, k); idx += 1
        bih = jax.random.uniform(keys[idx], (3 * HIDDEN_DIM,), jnp.float32, -k, k); idx += 1
        bhh = jax.random.uniform(keys[idx], (3 * HIDDEN_DIM,), jnp.float32, -k, k); idx += 1
        params["layers"].append((wih, whh, bih, bhh))
    params["fc_w"] = jax.random.uniform(keys[idx], (OUTPUT_DIM, HIDDEN_DIM), jnp.float32, -k, k); idx += 1
    params["fc_b"] = jax.random.uniform(keys[idx], (OUTPUT_DIM,), jnp.float32, -k, k)
    return params


@jax.jit
def gru_forward(x, params):
    """x: (B, T, INPUT_DIM) batch-first, like the PyTorch module. Returns (B, OUTPUT_DIM)."""
    B, T, I = x.shape
    H, G, GP = HIDDEN_DIM, GATE_DIM, GATE_PAD

    # time-major, flattened over (t, b) so the layer-0 gi hoist is a single op
    x_tm = jnp.transpose(x, (1, 0, 2)).astype(jnp.float32).reshape(T * B, I)

    flat = []
    for (wih, whh, bih, bhh) in params["layers"]:
        wih_p = jnp.zeros((wih.shape[1], GP), jnp.float32).at[:, :G].set(wih.T)
        whh_p = jnp.zeros((H, GP), jnp.float32).at[:, :G].set(whh.T)
        b_fold = jnp.zeros((1, GP), jnp.float32)
        b_fold = b_fold.at[0, :2 * H].set(bih[:2 * H] + bhh[:2 * H])   # r,z biases folded
        b_fold = b_fold.at[0, 2 * H:G].set(bih[2 * H:])                # n gate: only bih_n
        bhh_n = bhh[2 * H:].reshape(1, H)                              # applied per-step
        flat += [wih_p, whh_p, b_fold, bhh_n]

    fcw_p = jnp.zeros((H, OUT_PAD), jnp.float32).at[:, :OUTPUT_DIM].set(params["fc_w"].T)
    fcb_p = jnp.zeros((1, OUT_PAD), jnp.float32).at[0, :OUTPUT_DIM].set(params["fc_b"])
    flat += [fcw_p, fcb_p]

    n_inputs = 1 + len(flat)
    out_padded = pl.pallas_call(
        gru_kernel,
        out_shape=jax.ShapeDtypeStruct((B, OUT_PAD), jnp.float32),
        in_specs=[pl.BlockSpec(memory_space=pltpu.MemorySpace.VMEM)] * n_inputs,
        out_specs=pl.BlockSpec(memory_space=pltpu.MemorySpace.VMEM),
        scratch_shapes=[
            pltpu.VMEM((T * B, GP), jnp.float32),   # hoisted gate projections (gi), flat
            pltpu.VMEM((T * B, H), jnp.float32),    # layer-0 output sequence, flat
        ],
        # TODO(synk): for large B on v7x, add a batch grid with dimension_semantics=("parallel",)
        # so both TensorCores run independent batch shards of the recurrence.
    )(x_tm, *flat)
    return out_padded[:, :OUTPUT_DIM]


def gru_forward_ref(x, params):
    """Pure-JAX reference mirroring nn.GRU + fc for correctness checking."""
    B, T, _ = x.shape
    H = HIDDEN_DIM
    inp = x.astype(jnp.float32)
    for layer in range(NUM_LAYERS):
        wih, whh, bih, bhh = params["layers"][layer]
        h = jnp.zeros((B, H), jnp.float32)
        outs = []
        for t in range(T):
            x_t = inp[:, t, :]
            gi = x_t @ wih.T + bih
            gh = h @ whh.T + bhh
            r = jax.nn.sigmoid(gi[:, :H] + gh[:, :H])
            z = jax.nn.sigmoid(gi[:, H:2 * H] + gh[:, H:2 * H])
            n = jnp.tanh(gi[:, 2 * H:] + r * gh[:, 2 * H:])
            h = (1.0 - z) * n + z * h
            outs.append(h)
        inp = jnp.stack(outs, axis=1)
    return inp[:, -1, :] @ params["fc_w"].T + params["fc_b"]


if __name__ == "__main__":
    key = jax.random.PRNGKey(0)
    k_param, k_x = jax.random.split(key)

    params = init_params(k_param)

    B, T = 2, 8
    x = jax.random.normal(k_x, (B, T, INPUT_DIM), jnp.float32)

    out = gru_forward(x, params)
    out = jax.block_until_ready(out)

    ref = gru_forward_ref(x, params)
    assert out.shape == (B, OUTPUT_DIM)
    assert jnp.allclose(out, ref, atol=1e-4, rtol=1e-4), (out, ref)

    print("KERNEL_OK")
</pallas_src>

<mosaic_0001>
module attributes {stable_mosaic.version = 11 : i64} {
  func.func @gru_kernel(%arg0: memref<16x1xf32, #tpu.memory_space<vmem>>, %arg1: memref<1x128xf32, #tpu.memory_space<vmem>>, %arg2: memref<32x128xf32, #tpu.memory_space<vmem>>, %arg3: memref<1x128xf32, #tpu.memory_space<vmem>>, %arg4: memref<1x32xf32, #tpu.memory_space<vmem>>, %arg5: memref<32x128xf32, #tpu.memory_space<vmem>>, %arg6: memref<32x128xf32, #tpu.memory_space<vmem>>, %arg7: memref<1x128xf32, #tpu.memory_space<vmem>>, %arg8: memref<1x32xf32, #tpu.memory_space<vmem>>, %arg9: memref<32x128xf32, #tpu.memory_space<vmem>>, %arg10: memref<1x128xf32, #tpu.memory_space<vmem>>, %arg11: memref<2x128xf32, #tpu.memory_space<vmem>>, %arg12: memref<16x128xf32, #tpu.memory_space<vmem>>, %arg13: memref<16x32xf32, #tpu.memory_space<vmem>>) attributes {dimension_semantics = [], scalar_prefetch = 0 : i64, scratch_operands = 2 : i64, tpu.core_type = #tpu.core_type<tc>} {
    %c0 = arith.constant 0 : index
    %c0_0 = arith.constant 0 : index
    %0 = vector.load %arg0[%c0, %c0_0] : memref<16x1xf32, #tpu.memory_space<vmem>>, vector<16x1xf32>
    %c0_1 = arith.constant 0 : index
    %c0_2 = arith.constant 0 : index
    %1 = vector.load %arg1[%c0_1, %c0_2] : memref<1x128xf32, #tpu.memory_space<vmem>>, vector<1x128xf32>
    %2 = vector.broadcast %0 : vector<16x1xf32> to vector<16x128xf32>
    %3 = vector.broadcast %1 : vector<1x128xf32> to vector<16x128xf32>
    %4 = arith.mulf %2, %3 : vector<16x128xf32>
    %c0_3 = arith.constant 0 : index
    %c0_4 = arith.constant 0 : index
    %5 = vector.load %arg3[%c0_3, %c0_4] : memref<1x128xf32, #tpu.memory_space<vmem>>, vector<1x128xf32>
    %6 = vector.broadcast %5 : vector<1x128xf32> to vector<16x128xf32>
    %7 = arith.addf %4, %6 : vector<16x128xf32>
    %c0_5 = arith.constant 0 : index
    %c0_6 = arith.constant 0 : index
    %8 = vector.load %arg12[%c0_5, %c0_6] : memref<16x128xf32, #tpu.memory_space<vmem>>, vector<16x128xf32>
    tpu.vector_store %arg12[%c0_5, %c0_6], %7 {strides = array<i32>} : memref<16x128xf32, #tpu.memory_space<vmem>>, vector<16x128xf32>,
    %c0_7 = arith.constant 0 : index
    %c0_8 = arith.constant 0 : index
    %9 = vector.load %arg2[%c0_7, %c0_8] : memref<32x128xf32, #tpu.memory_space<vmem>>, vector<32x128xf32>
    %c0_9 = arith.constant 0 : index
    %c0_10 = arith.constant 0 : index
    %10 = vector.load %arg4[%c0_9, %c0_10] : memref<1x32xf32, #tpu.memory_space<vmem>>, vector<1x32xf32>
    %11 = vector.shape_cast %10 : vector<1x32xf32> to vector<1x32xf32>
    %12 = vector.broadcast %11 : vector<1x32xf32> to vector<2x32xf32>
    %cst = arith.constant 0.000000e+00 : f32
    %13 = vector.broadcast %cst : f32 to vector<2x32xf32>
    %c0_11 = arith.constant 0 : index
    %c0_12 = arith.constant 0 : index
    %14 = vector.load %arg12[%c0_11, %c0_12] : memref<16x128xf32, #tpu.memory_space<vmem>>, vector<2x128xf32>
    %cst_13 = arith.constant dense<0.000000e+00> : vector<2x128xf32>
    %15 = tpu.matmul %13, %9, %cst_13 {dimension_numbers = #tpu.dot_dimension_numbers<[1], [0], [0], [1], [0, 0, 1, 1], [], []>} : vector<2x32xf32>, vector<32x128xf32>, vector<2x128xf32> -> vector<2x128xf32>
    %16 = vector.extract_strided_slice %14 {offsets = [0, 0], sizes = [2, 32], strides = [1, 1]} : vector<2x128xf32> to vector<2x32xf32>
    %17 = vector.extract_strided_slice %15 {offsets = [0, 0], sizes = [2, 32], strides = [1, 1]} : vector<2x128xf32> to vector<2x32xf32>
    %18 = arith.addf %16, %17 : vector<2x32xf32>
    %19 = arith.negf %18 : vector<2x32xf32>
    %20 = math.exp %19 : vector<2x32xf32>
    %cst_14 = arith.constant 1.000000e+00 : f32
    %21 = vector.broadcast %cst_14 : f32 to vector<2x32xf32>
    %22 = arith.addf %21, %20 : vector<2x32xf32>
    %23 = arith.divf %21, %22 : vector<2x32xf32>
    %24 = vector.extract_strided_slice %14 {offsets = [0, 32], sizes = [2, 32], strides = [1, 1]} : vector<2x128xf32> to vector<2x32xf32>
    %25 = vector.extract_strided_slice %15 {offsets = [0, 32], sizes = [2, 32], strides = [1, 1]} : vector<2x128xf32> to vector<2x32xf32>
    %26 = arith.addf %24, %25 : vector<2x32xf32>
    %27 = arith.negf %26 : vector<2x32xf32>
    %28 = math.exp %27 : vector<2x32xf32>
    %cst_15 = arith.constant 1.000000e+00 : f32
    %29 = vector.broadcast %cst_15 : f32 to vector<2x32xf32>
    %30 = arith.addf %29, %28 : vector<2x32xf32>
    %31 = arith.divf %29, %30 : vector<2x32xf32>
    %32 = vector.extract_strided_slice %14 {offsets = [0, 64], sizes = [2, 32], strides = [1, 1]} : vector<2x128xf32> to vector<2x32xf32>
    %33 = vector.extract_strided_slice %15 {offsets = [0, 64], sizes = [2, 32], strides = [1, 1]} : vector<2x128xf32> to vector<2x32xf32>
    %34 = arith.addf %33, %12 : vector<2x32xf32>
    %35 = arith.mulf %23, %34 : vector<2x32xf32>
    %36 = arith.addf %32, %35 : vector<2x32xf32>
    %37 = math.tanh %36 : vector<2x32xf32>
    %38 = arith.subf %13, %37 : vector<2x32xf32>
    %39 = arith.mulf %31, %38 : vector<2x32xf32>
    %40 = arith.addf %37, %39 : vector<2x32xf32>
    %c0_16 = arith.constant 0 : index
    %c0_17 = arith.constant 0 : index
    %41 = vector.load %arg13[%c0_16, %c0_17] : memref<16x32xf32, #tpu.memory_space<vmem>>, vector<2x32xf32>
    tpu.vector_store %arg13[%c0_16, %c0_17], %40 {strides = array<i32>} : memref<16x32xf32, #tpu.memory_space<vmem>>, vector<2x32xf32>,
    %c2 = arith.constant 2 : index
    %c0_18 = arith.constant 0 : index
    %42 = vector.load %arg12[%c2, %c0_18] : memref<16x128xf32, #tpu.memory_space<vmem>>, vector<2x128xf32>
    %cst_19 = arith.constant dense<0.000000e+00> : vector<2x128xf32>
    %43 = tpu.matmul %40, %9, %cst_19 {dimension_numbers = #tpu.dot_dimension_numbers<[1], [0], [0], [1], [0, 0, 1, 1], [], []>} : vector<2x32xf32>, vector<32x128xf32>, vector<2x128xf32> -> vector<2x128xf32>
    %44 = vector.extract_strided_slice %42 {offsets = [0, 0], sizes = [2, 32], strides = [1, 1]} : vector<2x128xf32> to vector<2x32xf32>
    %45 = vector.extract_strided_slice %43 {offsets = [0, 0], sizes = [2, 32], strides = [1, 1]} : vector<2x128xf32> to vector<2x32xf32>
    %46 = arith.addf %44, %45 : vector<2x32xf32>
    %47 = arith.negf %46 : vector<2x32xf32>
    %48 = math.exp %47 : vector<2x32xf32>
    %cst_20 = arith.constant 1.000000e+00 : f32
    %49 = vector.broadcast %cst_20 : f32 to vector<2x32xf32>
    %50 = arith.addf %49, %48 : vector<2x32xf32>
    %51 = arith.divf %49, %50 : vector<2x32xf32>
    %52 = vector.extract_strided_slice %42 {offsets = [0, 32], sizes = [2, 32], strides = [1, 1]} : vector<2x128xf32> to vector<2x32xf32>
    %53 = vector.extract_strided_slice %43 {offsets = [0, 32], sizes = [2, 32], strides = [1, 1]} : vector<2x128xf32> to vector<2x32xf32>
    %54 = arith.addf %52, %53 : vector<2x32xf32>
    %55 = arith.negf %54 : vector<2x32xf32>
    %56 = math.exp %55 : vector<2x32xf32>
    %cst_21 = arith.constant 1.000000e+00 : f32
    %57 = vector.broadcast %cst_21 : f32 to vector<2x32xf32>
    %58 = arith.addf %57, %56 : vector<2x32xf32>
    %59 = arith.divf %57, %58 : vector<2x32xf32>
    %60 = vector.extract_strided_slice %42 {offsets = [0, 64], sizes = [2, 32], strides = [1, 1]} : vector<2x128xf32> to vector<2x32xf32>
    %61 = vector.extract_strided_slice %43 {offsets = [0, 64], sizes = [2, 32], strides = [1, 1]} : vector<2x128xf32> to vector<2x32xf32>
    %62 = arith.addf %61, %12 : vector<2x32xf32>
    %63 = arith.mulf %51, %62 : vector<2x32xf32>
    %64 = arith.addf %60, %63 : vector<2x32xf32>
    %65 = math.tanh %64 : vector<2x32xf32>
    %66 = arith.subf %40, %65 : vector<2x32xf32>
    %67 = arith.mulf %59, %66 : vector<2x32xf32>
    %68 = arith.addf %65, %67 : vector<2x32xf32>
    %c2_22 = arith.constant 2 : index
    %c0_23 = arith.constant 0 : index
    %69 = vector.load %arg13[%c2_22, %c0_23] : memref<16x32xf32, #tpu.memory_space<vmem>>, vector<2x32xf32>
    tpu.vector_store %arg13[%c2_22, %c0_23], %68 {strides = array<i32>} : memref<16x32xf32, #tpu.memory_space<vmem>>, vector<2x32xf32>,
    %c4 = arith.constant 4 : index
    %c0_24 = arith.constant 0 : index
    %70 = vector.load %arg12[%c4, %c0_24] : memref<16x128xf32, #tpu.memory_space<vmem>>, vector<2x128xf32>
    %cst_25 = arith.constant dense<0.000000e+00> : vector<2x128xf32>
    %71 = tpu.matmul %68, %9, %cst_25 {dimension_numbers = #tpu.dot_dimension_numbers<[1], [0], [0], [1], [0, 0, 1, 1], [], []>} : vector<2x32xf32>, vector<32x128xf32>, vector<2x128xf32> -> vector<2x128xf32>
    %72 = vector.extract_strided_slice %70 {offsets = [0, 0], sizes = [2, 32], strides = [1, 1]} : vector<2x128xf32> to vector<2x32xf32>
    %73 = vector.extract_strided_slice %71 {offsets = [0, 0], sizes = [2, 32], strides = [1, 1]} : vector<2x128xf32> to vector<2x32xf32>
    %74 = arith.addf %72, %73 : vector<2x32xf32>
    %75 = arith.negf %74 : vector<2x32xf32>
    %76 = math.exp %75 : vector<2x32xf32>
    %cst_26 = arith.constant 1.000000e+00 : f32
    %77 = vector.broadcast %cst_26 : f32 to vector<2x32xf32>
    %78 = arith.addf %77, %76 : vector<2x32xf32>
    %79 = arith.divf %77, %78 : vector<2x32xf32>
    %80 = vector.extract_strided_slice %70 {offsets = [0, 32], sizes = [2, 32], strides = [1, 1]} : vector<2x128xf32> to vector<2x32xf32>
    %81 = vector.extract_strided_slice %71 {offsets = [0, 32], sizes = [2, 32], strides = [1, 1]} : vector<2x128xf32> to vector<2x32xf32>
    %82 = arith.addf %80, %81 : vector<2x32xf32>
    %83 = arith.negf %82 : vector<2x32xf32>
    %84 = math.exp %83 : vector<2x32xf32>
    %cst_27 = arith.constant 1.000000e+00 : f32
    %85 = vector.broadcast %cst_27 : f32 to vector<2x32xf32>
    %86 = arith.addf %85, %84 : vector<2x32xf32>
    %87 = arith.divf %85, %86 : vector<2x32xf32>
    %88 = vector.extract_strided_slice %70 {offsets = [0, 64], sizes = [2, 32], strides = [1, 1]} : vector<2x128xf32> to vector<2x32xf32>
    %89 = vector.extract_strided_slice %71 {offsets = [0, 64], sizes = [2, 32], strides = [1, 1]} : vector<2x128xf32> to vector<2x32xf32>
    %90 = arith.addf %89, %12 : vector<2x32xf32>
    %91 = arith.mulf %79, %90 : vector<2x32xf32>
    %92 = arith.addf %88, %91 : vector<2x32xf32>
    %93 = math.tanh %92 : vector<2x32xf32>
    %94 = arith.subf %68, %93 : vector<2x32xf32>
    %95 = arith.mulf %87, %94 : vector<2x32xf32>
    %96 = arith.addf %93, %95 : vector<2x32xf32>
    %c4_28 = arith.constant 4 : index
    %c0_29 = arith.constant 0 : index
    %97 = vector.load %arg13[%c4_28, %c0_29] : memref<16x32xf32, #tpu.memory_space<vmem>>, vector<2x32xf32>
    tpu.vector_store %arg13[%c4_28, %c0_29], %96 {strides = array<i32>} : memref<16x32xf32, #tpu.memory_space<vmem>>, vector<2x32xf32>,
    %c6 = arith.constant 6 : index
    %c0_30 = arith.constant 0 : index
    %98 = vector.load %arg12[%c6, %c0_30] : memref<16x128xf32, #tpu.memory_space<vmem>>, vector<2x128xf32>
    %cst_31 = arith.constant dense<0.000000e+00> : vector<2x128xf32>
    %99 = tpu.matmul %96, %9, %cst_31 {dimension_numbers = #tpu.dot_dimension_numbers<[1], [0], [0], [1], [0, 0, 1, 1], [], []>} : vector<2x32xf32>, vector<32x128xf32>, vector<2x128xf32> -> vector<2x128xf32>
    %100 = vector.extract_strided_slice %98 {offsets = [0, 0], sizes = [2, 32], strides = [1, 1]} : vector<2x128xf32> to vector<2x32xf32>
    %101 = vector.extract_strided_slice %99 {offsets = [0, 0], sizes = [2, 32], strides = [1, 1]} : vector<2x128xf32> to vector<2x32xf32>
    %102 = arith.addf %100, %101 : vector<2x32xf32>
    %103 = arith.negf %102 : vector<2x32xf32>
    %104 = math.exp %103 : vector<2x32xf32>
    %cst_32 = arith.constant 1.000000e+00 : f32
    %105 = vector.broadcast %cst_32 : f32 to vector<2x32xf32>
    %106 = arith.addf %105, %104 : vector<2x32xf32>
    %107 = arith.divf %105, %106 : vector<2x32xf32>
    %108 = vector.extract_strided_slice %98 {offsets = [0, 32], sizes = [2, 32], strides = [1, 1]} : vector<2x128xf32> to vector<2x32xf32>
    %109 = vector.extract_strided_slice %99 {offsets = [0, 32], sizes = [2, 32], strides = [1, 1]} : vector<2x128xf32> to vector<2x32xf32>
    %110 = arith.addf %108, %109 : vector<2x32xf32>
    %111 = arith.negf %110 : vector<2x32xf32>
    %112 = math.exp %111 : vector<2x32xf32>
    %cst_33 = arith.constant 1.000000e+00 : f32
    %113 = vector.broadcast %cst_33 : f32 to vector<2x32xf32>
    %114 = arith.addf %113, %112 : vector<2x32xf32>
    %115 = arith.divf %113, %114 : vector<2x32xf32>
    %116 = vector.extract_strided_slice %98 {offsets = [0, 64], sizes = [2, 32], strides = [1, 1]} : vector<2x128xf32> to vector<2x32xf32>
    %117 = vector.extract_strided_slice %99 {offsets = [0, 64], sizes = [2, 32], strides = [1, 1]} : vector<2x128xf32> to vector<2x32xf32>
    %118 = arith.addf %117, %12 : vector<2x32xf32>
    %119 = arith.mulf %107, %118 : vector<2x32xf32>
    %120 = arith.addf %116, %119 : vector<2x32xf32>
    %121 = math.tanh %120 : vector<2x32xf32>
    %122 = arith.subf %96, %121 : vector<2x32xf32>
    %123 = arith.mulf %115, %122 : vector<2x32xf32>
    %124 = arith.addf %121, %123 : vector<2x32xf32>
    %c6_34 = arith.constant 6 : index
    %c0_35 = arith.constant 0 : index
    %125 = vector.load %arg13[%c6_34, %c0_35] : memref<16x32xf32, #tpu.memory_space<vmem>>, vector<2x32xf32>
    tpu.vector_store %arg13[%c6_34, %c0_35], %124 {strides = array<i32>} : memref<16x32xf32, #tpu.memory_space<vmem>>, vector<2x32xf32>,
    %c8 = arith.constant 8 : index
    %c0_36 = arith.constant 0 : index
    %126 = vector.load %arg12[%c8, %c0_36] : memref<16x128xf32, #tpu.memory_space<vmem>>, vector<2x128xf32>
    %cst_37 = arith.constant dense<0.000000e+00> : vector<2x128xf32>
    %127 = tpu.matmul %124, %9, %cst_37 {dimension_numbers = #tpu.dot_dimension_numbers<[1], [0], [0], [1], [0, 0, 1, 1], [], []>} : vector<2x32xf32>, vector<32x128xf32>, vector<2x128xf32> -> vector<2x128xf32>
    %128 = vector.extract_strided_slice %126 {offsets = [0, 0], sizes = [2, 32], strides = [1, 1]} : vector<2x128xf32> to vector<2x32xf32>
    %129 = vector.extract_strided_slice %127 {offsets = [0, 0], sizes = [2, 32], strides = [1, 1]} : vector<2x128xf32> to vector<2x32xf32>
    %130 = arith.addf %128, %129 : vector<2x32xf32>
    %131 = arith.negf %130 : vector<2x32xf32>
    %132 = math.exp %131 : vector<2x32xf32>
    %cst_38 = arith.constant 1.000000e+00 : f32
    %133 = vector.broadcast %cst_38 : f32 to vector<2x32xf32>
    %134 = arith.addf %133, %132 : vector<2x32xf32>
    %135 = arith.divf %133, %134 : vector<2x32xf32>
    %136 = vector.extract_strided_slice %126 {offsets = [0, 32], sizes = [2, 32], strides = [1, 1]} : vector<2x128xf32> to vector<2x32xf32>
    %137 = vector.extract_strided_slice %127 {offsets = [0, 32], sizes = [2, 32], strides = [1, 1]} : vector<2x128xf32> to vector<2x32xf32>
    %138 = arith.addf %136, %137 : vector<2x32xf32>
    %139 = arith.negf %138 : vector<2x32xf32>
    %140 = math.exp %139 : vector<2x32xf32>
    %cst_39 = arith.constant 1.000000e+00 : f32
    %141 = vector.broadcast %cst_39 : f32 to vector<2x32xf32>
    %142 = arith.addf %141, %140 : vector<2x32xf32>
    %143 = arith.divf %141, %142 : vector<2x32xf32>
    %144 = vector.extract_strided_slice %126 {offsets = [0, 64], sizes = [2, 32], strides = [1, 1]} : vector<2x128xf32> to vector<2x32xf32>
    %145 = vector.extract_strided_slice %127 {offsets = [0, 64], sizes = [2, 32], strides = [1, 1]} : vector<2x128xf32> to vector<2x32xf32>
    %146 = arith.addf %145, %12 : vector<2x32xf32>
    %147 = arith.mulf %135, %146 : vector<2x32xf32>
    %148 = arith.addf %144, %147 : vector<2x32xf32>
    %149 = math.tanh %148 : vector<2x32xf32>
    %150 = arith.subf %124, %149 : vector<2x32xf32>
    %151 = arith.mulf %143, %150 : vector<2x32xf32>
    %152 = arith.addf %149, %151 : vector<2x32xf32>
    %c8_40 = arith.constant 8 : index
    %c0_41 = arith.constant 0 : index
    %153 = vector.load %arg13[%c8_40, %c0_41] : memref<16x32xf32, #tpu.memory_space<vmem>>, vector<2x32xf32>
    tpu.vector_store %arg13[%c8_40, %c0_41], %152 {strides = array<i32>} : memref<16x32xf32, #tpu.memory_space<vmem>>, vector<2x32xf32>,
    %c10 = arith.constant 10 : index
    %c0_42 = arith.constant 0 : index
    %154 = vector.load %arg12[%c10, %c0_42] : memref<16x128xf32, #tpu.memory_space<vmem>>, vector<2x128xf32>
    %cst_43 = arith.constant dense<0.000000e+00> : vector<2x128xf32>
    %155 = tpu.matmul %152, %9, %cst_43 {dimension_numbers = #tpu.dot_dimension_numbers<[1], [0], [0], [1], [0, 0, 1, 1], [], []>} : vector<2x32xf32>, vector<32x128xf32>, vector<2x128xf32> -> vector<2x128xf32>
    %156 = vector.extract_strided_slice %154 {offsets = [0, 0], sizes = [2, 32], strides = [1, 1]} : vector<2x128xf32> to vector<2x32xf32>
    %157 = vector.extract_strided_slice %155 {offsets = [0, 0], sizes = [2, 32], strides = [1, 1]} : vector<2x128xf32> to vector<2x32xf32>
    %158 = arith.addf %156, %157 : vector<2x32xf32>
    %159 = arith.negf %158 : vector<2x32xf32>
    %160 = math.exp %159 : vector<2x32xf32>
    %cst_44 = arith.constant 1.000000e+00 : f32
    %161 = vector.broadcast %cst_44 : f32 to vector<2x32xf32>
    %162 = arith.addf %161, %160 : vector<2x32xf32>
    %163 = arith.divf %161, %162 : vector<2x32xf32>
    %164 = vector.extract_strided_slice %154 {offsets = [0, 32], sizes = [2, 32], strides = [1, 1]} : vector<2x128xf32> to vector<2x32xf32>
    %165 = vector.extract_strided_slice %155 {offsets = [0, 32], sizes = [2, 32], strides = [1, 1]} : vector<2x128xf32> to vector<2x32xf32>
    %166 = arith.addf %164, %165 : vector<2x32xf32>
    %167 = arith.negf %166 : vector<2x32xf32>
    %168 = math.exp %167 : vector<2x32xf32>
    %cst_45 = arith.constant 1.000000e+00 : f32
    %169 = vector.broadcast %cst_45 : f32 to vector<2x32xf32>
    %170 = arith.addf %169, %168 : vector<2x32xf32>
    %171 = arith.divf %169, %170 : vector<2x32xf32>
    %172 = vector.extract_strided_slice %154 {offsets = [0, 64], sizes = [2, 32], strides = [1, 1]} : vector<2x128xf32> to vector<2x32xf32>
    %173 = vector.extract_strided_slice %155 {offsets = [0, 64], sizes = [2, 32], strides = [1, 1]} : vector<2x128xf32> to vector<2x32xf32>
    %174 = arith.addf %173, %12 : vector<2x32xf32>
    %175 = arith.mulf %163, %174 : vector<2x32xf32>
    %176 = arith.addf %172, %175 : vector<2x32xf32>
    %177 = math.tanh %176 : vector<2x32xf32>
    %178 = arith.subf %152, %177 : vector<2x32xf32>
    %179 = arith.mulf %171, %178 : vector<2x32xf32>
    %180 = arith.addf %177, %179 : vector<2x32xf32>
    %c10_46 = arith.constant 10 : index
    %c0_47 = arith.constant 0 : index
    %181 = vector.load %arg13[%c10_46, %c0_47] : memref<16x32xf32, #tpu.memory_space<vmem>>, vector<2x32xf32>
    tpu.vector_store %arg13[%c10_46, %c0_47], %180 {strides = array<i32>} : memref<16x32xf32, #tpu.memory_space<vmem>>, vector<2x32xf32>,
    %c12 = arith.constant 12 : index
    %c0_48 = arith.constant 0 : index
    %182 = vector.load %arg12[%c12, %c0_48] : memref<16x128xf32, #tpu.memory_space<vmem>>, vector<2x128xf32>
    %cst_49 = arith.constant dense<0.000000e+00> : vector<2x128xf32>
    %183 = tpu.matmul %180, %9, %cst_49 {dimension_numbers = #tpu.dot_dimension_numbers<[1], [0], [0], [1], [0, 0, 1, 1], [], []>} : vector<2x32xf32>, vector<32x128xf32>, vector<2x128xf32> -> vector<2x128xf32>
    %184 = vector.extract_strided_slice %182 {offsets = [0, 0], sizes = [2, 32], strides = [1, 1]} : vector<2x128xf32> to vector<2x32xf32>
    %185 = vector.extract_strided_slice %183 {offsets = [0, 0], sizes = [2, 32], strides = [1, 1]} : vector<2x128xf32> to vector<2x32xf32>
    %186 = arith.addf %184, %185 : vector<2x32xf32>
    %187 = arith.negf %186 : vector<2x32xf32>
    %188 = math.exp %187 : vector<2x32xf32>
    %cst_50 = arith.constant 1.000000e+00 : f32
    %189 = vector.broadcast %cst_50 : f32 to vector<2x32xf32>
    %190 = arith.addf %189, %188 : vector<2x32xf32>
    %191 = arith.divf %189, %190 : vector<2x32xf32>
    %192 = vector.extract_strided_slice %182 {offsets = [0, 32], sizes = [2, 32], strides = [1, 1]} : vector<2x128xf32> to vector<2x32xf32>
    %193 = vector.extract_strided_slice %183 {offsets = [0, 32], sizes = [2, 32], strides = [1, 1]} : vector<2x128xf32> to vector<2x32xf32>
    %194 = arith.addf %192, %193 : vector<2x32xf32>
    %195 = arith.negf %194 : vector<2x32xf32>
    %196 = math.exp %195 : vector<2x32xf32>
    %cst_51 = arith.constant 1.000000e+00 : f32
    %197 = vector.broadcast %cst_51 : f32 to vector<2x32xf32>
    %198 = arith.addf %197, %196 : vector<2x32xf32>
    %199 = arith.divf %197, %198 : vector<2x32xf32>
    %200 = vector.extract_strided_slice %182 {offsets = [0, 64], sizes = [2, 32], strides = [1, 1]} : vector<2x128xf32> to vector<2x32xf32>
    %201 = vector.extract_strided_slice %183 {offsets = [0, 64], sizes = [2, 32], strides = [1, 1]} : vector<2x128xf32> to vector<2x32xf32>
    %202 = arith.addf %201, %12 : vector<2x32xf32>
    %203 = arith.mulf %191, %202 : vector<2x32xf32>
    %204 = arith.addf %200, %203 : vector<2x32xf32>
    %205 = math.tanh %204 : vector<2x32xf32>
    %206 = arith.subf %180, %205 : vector<2x32xf32>
    %207 = arith.mulf %199, %206 : vector<2x32xf32>
    %208 = arith.addf %205, %207 : vector<2x32xf32>
    %c12_52 = arith.constant 12 : index
    %c0_53 = arith.constant 0 : index
    %209 = vector.load %arg13[%c12_52, %c0_53] : memref<16x32xf32, #tpu.memory_space<vmem>>, vector<2x32xf32>
    tpu.vector_store %arg13[%c12_52, %c0_53], %208 {strides = array<i32>} : memref<16x32xf32, #tpu.memory_space<vmem>>, vector<2x32xf32>,
    %c14 = arith.constant 14 : index
    %c0_54 = arith.constant 0 : index
    %210 = vector.load %arg12[%c14, %c0_54] : memref<16x128xf32, #tpu.memory_space<vmem>>, vector<2x128xf32>
    %cst_55 = arith.constant dense<0.000000e+00> : vector<2x128xf32>
    %211 = tpu.matmul %208, %9, %cst_55 {dimension_numbers = #tpu.dot_dimension_numbers<[1], [0], [0], [1], [0, 0, 1, 1], [], []>} : vector<2x32xf32>, vector<32x128xf32>, vector<2x128xf32> -> vector<2x128xf32>
    %212 = vector.extract_strided_slice %210 {offsets = [0, 0], sizes = [2, 32], strides = [1, 1]} : vector<2x128xf32> to vector<2x32xf32>
    %213 = vector.extract_strided_slice %211 {offsets = [0, 0], sizes = [2, 32], strides = [1, 1]} : vector<2x128xf32> to vector<2x32xf32>
    %214 = arith.addf %212, %213 : vector<2x32xf32>
    %215 = arith.negf %214 : vector<2x32xf32>
    %216 = math.exp %215 : vector<2x32xf32>
    %cst_56 = arith.constant 1.000000e+00 : f32
    %217 = vector.broadcast %cst_56 : f32 to vector<2x32xf32>
    %218 = arith.addf %217, %216 : vector<2x32xf32>
    %219 = arith.divf %217, %218 : vector<2x32xf32>
    %220 = vector.extract_strided_slice %210 {offsets = [0, 32], sizes = [2, 32], strides = [1, 1]} : vector<2x128xf32> to vector<2x32xf32>
    %221 = vector.extract_strided_slice %211 {offsets = [0, 32], sizes = [2, 32], strides = [1, 1]} : vector<2x128xf32> to vector<2x32xf32>
    %222 = arith.addf %220, %221 : vector<2x32xf32>
    %223 = arith.negf %222 : vector<2x32xf32>
    %224 = math.exp %223 : vector<2x32xf32>
    %cst_57 = arith.constant 1.000000e+00 : f32
    %225 = vector.broadcast %cst_57 : f32 to vector<2x32xf32>
    %226 = arith.addf %225, %224 : vector<2x32xf32>
    %227 = arith.divf %225, %226 : vector<2x32xf32>
    %228 = vector.extract_strided_slice %210 {offsets = [0, 64], sizes = [2, 32], strides = [1, 1]} : vector<2x128xf32> to vector<2x32xf32>
    %229 = vector.extract_strided_slice %211 {offsets = [0, 64], sizes = [2, 32], strides = [1, 1]} : vector<2x128xf32> to vector<2x32xf32>
    %230 = arith.addf %229, %12 : vector<2x32xf32>
    %231 = arith.mulf %219, %230 : vector<2x32xf32>
    %232 = arith.addf %228, %231 : vector<2x32xf32>
    %233 = math.tanh %232 : vector<2x32xf32>
    %234 = arith.subf %208, %233 : vector<2x32xf32>
    %235 = arith.mulf %227, %234 : vector<2x32xf32>
    %236 = arith.addf %233, %235 : vector<2x32xf32>
    %c14_58 = arith.constant 14 : index
    %c0_59 = arith.constant 0 : index
    %237 = vector.load %arg13[%c14_58, %c0_59] : memref<16x32xf32, #tpu.memory_space<vmem>>, vector<2x32xf32>
    tpu.vector_store %arg13[%c14_58, %c0_59], %236 {strides = array<i32>} : memref<16x32xf32, #tpu.memory_space<vmem>>, vector<2x32xf32>,
    %c0_60 = arith.constant 0 : index
    %c0_61 = arith.constant 0 : index
    %238 = vector.load %arg13[%c0_60, %c0_61] : memref<16x32xf32, #tpu.memory_space<vmem>>, vector<16x32xf32>
    %c0_62 = arith.constant 0 : index
    %c0_63 = arith.constant 0 : index
    %239 = vector.load %arg5[%c0_62, %c0_63] : memref<32x128xf32, #tpu.memory_space<vmem>>, vector<32x128xf32>
    %cst_64 = arith.constant dense<0.000000e+00> : vector<16x128xf32>
    %240 = tpu.matmul %238, %239, %cst_64 {dimension_numbers = #tpu.dot_dimension_numbers<[1], [0], [0], [1], [0, 0, 1, 1], [], []>} : vector<16x32xf32>, vector<32x128xf32>, vector<16x128xf32> -> vector<16x128xf32>
    %c0_65 = arith.constant 0 : index
    %c0_66 = arith.constant 0 : index
    %241 = vector.load %arg7[%c0_65, %c0_66] : memref<1x128xf32, #tpu.memory_space<vmem>>, vector<1x128xf32>
    %242 = vector.broadcast %241 : vector<1x128xf32> to vector<16x128xf32>
    %243 = arith.addf %240, %242 : vector<16x128xf32>
    %c0_67 = arith.constant 0 : index
    %c0_68 = arith.constant 0 : index
    %244 = vector.load %arg12[%c0_67, %c0_68] : memref<16x128xf32, #tpu.memory_space<vmem>>, vector<16x128xf32>
    tpu.vector_store %arg12[%c0_67, %c0_68], %243 {strides = array<i32>} : memref<16x128xf32, #tpu.memory_space<vmem>>, vector<16x128xf32>,
    %c0_69 = arith.constant 0 : index
    %c0_70 = arith.constant 0 : index
    %245 = vector.load %arg6[%c0_69, %c0_70] : memref<32x128xf32, #tpu.memory_space<vmem>>, vector<32x128xf32>
    %c0_71 = arith.constant 0 : index
    %c0_72 = arith.constant 0 : index
    %246 = vector.load %arg8[%c0_71, %c0_72] : memref<1x32xf32, #tpu.memory_space<vmem>>, vector<1x32xf32>
    %247 = vector.shape_cast %246 : vector<1x32xf32> to vector<1x32xf32>
    %248 = vector.broadcast %247 : vector<1x32xf32> to vector<2x32xf32>
    %cst_73 = arith.constant 0.000000e+00 : f32
    %249 = vector.broadcast %cst_73 : f32 to vector<2x32xf32>
    %c0_74 = arith.constant 0 : index
    %c0_75 = arith.constant 0 : index
    %250 = vector.load %arg12[%c0_74, %c0_75] : memref<16x128xf32, #tpu.memory_space<vmem>>, vector<2x128xf32>
    %cst_76 = arith.constant dense<0.000000e+00> : vector<2x128xf32>
    %251 = tpu.matmul %249, %245, %cst_76 {dimension_numbers = #tpu.dot_dimension_numbers<[1], [0], [0], [1], [0, 0, 1, 1], [], []>} : vector<2x32xf32>, vector<32x128xf32>, vector<2x128xf32> -> vector<2x128xf32>
    %252 = vector.extract_strided_slice %250 {offsets = [0, 0], sizes = [2, 32], strides = [1, 1]} : vector<2x128xf32> to vector<2x32xf32>
    %253 = vector.extract_strided_slice %251 {offsets = [0, 0], sizes = [2, 32], strides = [1, 1]} : vector<2x128xf32> to vector<2x32xf32>
    %254 = arith.addf %252, %253 : vector<2x32xf32>
    %255 = arith.negf %254 : vector<2x32xf32>
    %256 = math.exp %255 : vector<2x32xf32>
    %cst_77 = arith.constant 1.000000e+00 : f32
    %257 = vector.broadcast %cst_77 : f32 to vector<2x32xf32>
    %258 = arith.addf %257, %256 : vector<2x32xf32>
    %259 = arith.divf %257, %258 : vector<2x32xf32>
    %260 = vector.extract_strided_slice %250 {offsets = [0, 32], sizes = [2, 32], strides = [1, 1]} : vector<2x128xf32> to vector<2x32xf32>
    %261 = vector.extract_strided_slice %251 {offsets = [0, 32], sizes = [2, 32], strides = [1, 1]} : vector<2x128xf32> to vector<2x32xf32>
    %262 = arith.addf %260, %261 : vector<2x32xf32>
    %263 = arith.negf %262 : vector<2x32xf32>
    %264 = math.exp %263 : vector<2x32xf32>
    %cst_78 = arith.constant 1.000000e+00 : f32
    %265 = vector.broadcast %cst_78 : f32 to vector<2x32xf32>
    %266 = arith.addf %265, %264 : vector<2x32xf32>
    %267 = arith.divf %265, %266 : vector<2x32xf32>
    %268 = vector.extract_strided_slice %250 {offsets = [0, 64], sizes = [2, 32], strides = [1, 1]} : vector<2x128xf32> to vector<2x32xf32>
    %269 = vector.extract_strided_slice %251 {offsets = [0, 64], sizes = [2, 32], strides = [1, 1]} : vector<2x128xf32> to vector<2x32xf32>
    %270 = arith.addf %269, %248 : vector<2x32xf32>
    %271 = arith.mulf %259, %270 : vector<2x32xf32>
    %272 = arith.addf %268, %271 : vector<2x32xf32>
    %273 = math.tanh %272 : vector<2x32xf32>
    %274 = arith.subf %249, %273 : vector<2x32xf32>
    %275 = arith.mulf %267, %274 : vector<2x32xf32>
    %276 = arith.addf %273, %275 : vector<2x32xf32>
    %c2_79 = arith.constant 2 : index
    %c0_80 = arith.constant 0 : index
    %277 = vector.load %arg12[%c2_79, %c0_80] : memref<16x128xf32, #tpu.memory_space<vmem>>, vector<2x128xf32>
    %cst_81 = arith.constant dense<0.000000e+00> : vector<2x128xf32>
    %278 = tpu.matmul %276, %245, %cst_81 {dimension_numbers = #tpu.dot_dimension_numbers<[1], [0], [0], [1], [0, 0, 1, 1], [], []>} : vector<2x32xf32>, vector<32x128xf32>, vector<2x128xf32> -> vector<2x128xf32>
    %279 = vector.extract_strided_slice %277 {offsets = [0, 0], sizes = [2, 32], strides = [1, 1]} : vector<2x128xf32> to vector<2x32xf32>
    %280 = vector.extract_strided_slice %278 {offsets = [0, 0], sizes = [2, 32], strides = [1, 1]} : vector<2x128xf32> to vector<2x32xf32>
    %281 = arith.addf %279, %280 : vector<2x32xf32>
    %282 = arith.negf %281 : vector<2x32xf32>
    %283 = math.exp %282 : vector<2x32xf32>
    %cst_82 = arith.constant 1.000000e+00 : f32
    %284 = vector.broadcast %cst_82 : f32 to vector<2x32xf32>
    %285 = arith.addf %284, %283 : vector<2x32xf32>
    %286 = arith.divf %284, %285 : vector<2x32xf32>
    %287 = vector.extract_strided_slice %277 {offsets = [0, 32], sizes = [2, 32], strides = [1, 1]} : vector<2x128xf32> to vector<2x32xf32>
    %288 = vector.extract_strided_slice %278 {offsets = [0, 32], sizes = [2, 32], strides = [1, 1]} : vector<2x128xf32> to vector<2x32xf32>
    %289 = arith.addf %287, %288 : vector<2x32xf32>
    %290 = arith.negf %289 : vector<2x32xf32>
    %291 = math.exp %290 : vector<2x32xf32>
    %cst_83 = arith.constant 1.000000e+00 : f32
    %292 = vector.broadcast %cst_83 : f32 to vector<2x32xf32>
    %293 = arith.addf %292, %291 : vector<2x32xf32>
    %294 = arith.divf %292, %293 : vector<2x32xf32>
    %295 = vector.extract_strided_slice %277 {offsets = [0, 64], sizes = [2, 32], strides = [1, 1]} : vector<2x128xf32> to vector<2x32xf32>
    %296 = vector.extract_strided_slice %278 {offsets = [0, 64], sizes = [2, 32], strides = [1, 1]} : vector<2x128xf32> to vector<2x32xf32>
    %297 = arith.addf %296, %248 : vector<2x32xf32>
    %298 = arith.mulf %286, %297 : vector<2x32xf32>
    %299 = arith.addf %295, %298 : vector<2x32xf32>
    %300 = math.tanh %299 : vector<2x32xf32>
    %301 = arith.subf %276, %300 : vector<2x32xf32>
    %302 = arith.mulf %294, %301 : vector<2x32xf32>
    %303 = arith.addf %300, %302 : vector<2x32xf32>
    %c4_84 = arith.constant 4 : index
    %c0_85 = arith.constant 0 : index
    %304 = vector.load %arg12[%c4_84, %c0_85] : memref<16x128xf32, #tpu.memory_space<vmem>>, vector<2x128xf32>
    %cst_86 = arith.constant dense<0.000000e+00> : vector<2x128xf32>
    %305 = tpu.matmul %303, %245, %cst_86 {dimension_numbers = #tpu.dot_dimension_numbers<[1], [0], [0], [1], [0, 0, 1, 1], [], []>} : vector<2x32xf32>, vector<32x128xf32>, vector<2x128xf32> -> vector<2x128xf32>
    %306 = vector.extract_strided_slice %304 {offsets = [0, 0], sizes = [2, 32], strides = [1, 1]} : vector<2x128xf32> to vector<2x32xf32>
    %307 = vector.extract_strided_slice %305 {offsets = [0, 0], sizes = [2, 32], strides = [1, 1]} : vector<2x128xf32> to vector<2x32xf32>
    %308 = arith.addf %306, %307 : vector<2x32xf32>
    %309 = arith.negf %308 : vector<2x32xf32>
    %310 = math.exp %309 : vector<2x32xf32>
    %cst_87 = arith.constant 1.000000e+00 : f32
    %311 = vector.broadcast %cst_87 : f32 to vector<2x32xf32>
    %312 = arith.addf %311, %310 : vector<2x32xf32>
    %313 = arith.divf %311, %312 : vector<2x32xf32>
    %314 = vector.extract_strided_slice %304 {offsets = [0, 32], sizes = [2, 32], strides = [1, 1]} : vector<2x128xf32> to vector<2x32xf32>
    %315 = vector.extract_strided_slice %305 {offsets = [0, 32], sizes = [2, 32], strides = [1, 1]} : vector<2x128xf32> to vector<2x32xf32>
    %316 = arith.addf %314, %315 : vector<2x32xf32>
    %317 = arith.negf %316 : vector<2x32xf32>
    %318 = math.exp %317 : vector<2x32xf32>
    %cst_88 = arith.constant 1.000000e+00 : f32
    %319 = vector.broadcast %cst_88 : f32 to vector<2x32xf32>
    %320 = arith.addf %319, %318 : vector<2x32xf32>
    %321 = arith.divf %319, %320 : vector<2x32xf32>
    %322 = vector.extract_strided_slice %304 {offsets = [0, 64], sizes = [2, 32], strides = [1, 1]} : vector<2x128xf32> to vector<2x32xf32>
    %323 = vector.extract_strided_slice %305 {offsets = [0, 64], sizes = [2, 32], strides = [1, 1]} : vector<2x128xf32> to vector<2x32xf32>
    %324 = arith.addf %323, %248 : vector<2x32xf32>
    %325 = arith.mulf %313, %324 : vector<2x32xf32>
    %326 = arith.addf %322, %325 : vector<2x32xf32>
    %327 = math.tanh %326 : vector<2x32xf32>
    %328 = arith.subf %303, %327 : vector<2x32xf32>
    %329 = arith.mulf %321, %328 : vector<2x32xf32>
    %330 = arith.addf %327, %329 : vector<2x32xf32>
    %c6_89 = arith.constant 6 : index
    %c0_90 = arith.constant 0 : index
    %331 = vector.load %arg12[%c6_89, %c0_90] : memref<16x128xf32, #tpu.memory_space<vmem>>, vector<2x128xf32>
    %cst_91 = arith.constant dense<0.000000e+00> : vector<2x128xf32>
    %332 = tpu.matmul %330, %245, %cst_91 {dimension_numbers = #tpu.dot_dimension_numbers<[1], [0], [0], [1], [0, 0, 1, 1], [], []>} : vector<2x32xf32>, vector<32x128xf32>, vector<2x128xf32> -> vector<2x128xf32>
    %333 = vector.extract_strided_slice %331 {offsets = [0, 0], sizes = [2, 32], strides = [1, 1]} : vector<2x128xf32> to vector<2x32xf32>
    %334 = vector.extract_strided_slice %332 {offsets = [0, 0], sizes = [2, 32], strides = [1, 1]} : vector<2x128xf32> to vector<2x32xf32>
    %335 = arith.addf %333, %334 : vector<2x32xf32>
    %336 = arith.negf %335 : vector<2x32xf32>
    %337 = math.exp %336 : vector<2x32xf32>
    %cst_92 = arith.constant 1.000000e+00 : f32
    %338 = vector.broadcast %cst_92 : f32 to vector<2x32xf32>
    %339 = arith.addf %338, %337 : vector<2x32xf32>
    %340 = arith.divf %338, %339 : vector<2x32xf32>
    %341 = vector.extract_strided_slice %331 {offsets = [0, 32], sizes = [2, 32], strides = [1, 1]} : vector<2x128xf32> to vector<2x32xf32>
    %342 = vector.extract_strided_slice %332 {offsets = [0, 32], sizes = [2, 32], strides = [1, 1]} : vector<2x128xf32> to vector<2x32xf32>
    %343 = arith.addf %341, %342 : vector<2x32xf32>
    %344 = arith.negf %343 : vector<2x32xf32>
    %345 = math.exp %344 : vector<2x32xf32>
    %cst_93 = arith.constant 1.000000e+00 : f32
    %346 = vector.broadcast %cst_93 : f32 to vector<2x32xf32>
    %347 = arith.addf %346, %345 : vector<2x32xf32>
    %348 = arith.divf %346, %347 : vector<2x32xf32>
    %349 = vector.extract_strided_slice %331 {offsets = [0, 64], sizes = [2, 32], strides = [1, 1]} : vector<2x128xf32> to vector<2x32xf32>
    %350 = vector.extract_strided_slice %332 {offsets = [0, 64], sizes = [2, 32], strides = [1, 1]} : vector<2x128xf32> to vector<2x32xf32>
    %351 = arith.addf %350, %248 : vector<2x32xf32>
    %352 = arith.mulf %340, %351 : vector<2x32xf32>
    %353 = arith.addf %349, %352 : vector<2x32xf32>
    %354 = math.tanh %353 : vector<2x32xf32>
    %355 = arith.subf %330, %354 : vector<2x32xf32>
    %356 = arith.mulf %348, %355 : vector<2x32xf32>
    %357 = arith.addf %354, %356 : vector<2x32xf32>
    %c8_94 = arith.constant 8 : index
    %c0_95 = arith.constant 0 : index
    %358 = vector.load %arg12[%c8_94, %c0_95] : memref<16x128xf32, #tpu.memory_space<vmem>>, vector<2x128xf32>
    %cst_96 = arith.constant dense<0.000000e+00> : vector<2x128xf32>
    %359 = tpu.matmul %357, %245, %cst_96 {dimension_numbers = #tpu.dot_dimension_numbers<[1], [0], [0], [1], [0, 0, 1, 1], [], []>} : vector<2x32xf32>, vector<32x128xf32>, vector<2x128xf32> -> vector<2x128xf32>
    %360 = vector.extract_strided_slice %358 {offsets = [0, 0], sizes = [2, 32], strides = [1, 1]} : vector<2x128xf32> to vector<2x32xf32>
    %361 = vector.extract_strided_slice %359 {offsets = [0, 0], sizes = [2, 32], strides = [1, 1]} : vector<2x128xf32> to vector<2x32xf32>
    %362 = arith.addf %360, %361 : vector<2x32xf32>
    %363 = arith.negf %362 : vector<2x32xf32>
    %364 = math.exp %363 : vector<2x32xf32>
    %cst_97 = arith.constant 1.000000e+00 : f32
    %365 = vector.broadcast %cst_97 : f32 to vector<2x32xf32>
    %366 = arith.addf %365, %364 : vector<2x32xf32>
    %367 = arith.divf %365, %366 : vector<2x32xf32>
    %368 = vector.extract_strided_slice %358 {offsets = [0, 32], sizes = [2, 32], strides = [1, 1]} : vector<2x128xf32> to vector<2x32xf32>
    %369 = vector.extract_strided_slice %359 {offsets = [0, 32], sizes = [2, 32], strides = [1, 1]} : vector<2x128xf32> to vector<2x32xf32>
    %370 = arith.addf %368, %369 : vector<2x32xf32>
    %371 = arith.negf %370 : vector<2x32xf32>
    %372 = math.exp %371 : vector<2x32xf32>
    %cst_98 = arith.constant 1.000000e+00 : f32
    %373 = vector.broadcast %cst_98 : f32 to vector<2x32xf32>
    %374 = arith.addf %373, %372 : vector<2x32xf32>
    %375 = arith.divf %373, %374 : vector<2x32xf32>
    %376 = vector.extract_strided_slice %358 {offsets = [0, 64], sizes = [2, 32], strides = [1, 1]} : vector<2x128xf32> to vector<2x32xf32>
    %377 = vector.extract_strided_slice %359 {offsets = [0, 64], sizes = [2, 32], strides = [1, 1]} : vector<2x128xf32> to vector<2x32xf32>
    %378 = arith.addf %377, %248 : vector<2x32xf32>
    %379 = arith.mulf %367, %378 : vector<2x32xf32>
    %380 = arith.addf %376, %379 : vector<2x32xf32>
    %381 = math.tanh %380 : vector<2x32xf32>
    %382 = arith.subf %357, %381 : vector<2x32xf32>
    %383 = arith.mulf %375, %382 : vector<2x32xf32>
    %384 = arith.addf %381, %383 : vector<2x32xf32>
    %c10_99 = arith.constant 10 : index
    %c0_100 = arith.constant 0 : index
    %385 = vector.load %arg12[%c10_99, %c0_100] : memref<16x128xf32, #tpu.memory_space<vmem>>, vector<2x128xf32>
    %cst_101 = arith.constant dense<0.000000e+00> : vector<2x128xf32>
    %386 = tpu.matmul %384, %245, %cst_101 {dimension_numbers = #tpu.dot_dimension_numbers<[1], [0], [0], [1], [0, 0, 1, 1], [], []>} : vector<2x32xf32>, vector<32x128xf32>, vector<2x128xf32> -> vector<2x128xf32>
    %387 = vector.extract_strided_slice %385 {offsets = [0, 0], sizes = [2, 32], strides = [1, 1]} : vector<2x128xf32> to vector<2x32xf32>
    %388 = vector.extract_strided_slice %386 {offsets = [0, 0], sizes = [2, 32], strides = [1, 1]} : vector<2x128xf32> to vector<2x32xf32>
    %389 = arith.addf %387, %388 : vector<2x32xf32>
    %390 = arith.negf %389 : vector<2x32xf32>
    %391 = math.exp %390 : vector<2x32xf32>
    %cst_102 = arith.constant 1.000000e+00 : f32
    %392 = vector.broadcast %cst_102 : f32 to vector<2x32xf32>
    %393 = arith.addf %392, %391 : vector<2x32xf32>
    %394 = arith.divf %392, %393 : vector<2x32xf32>
    %395 = vector.extract_strided_slice %385 {offsets = [0, 32], sizes = [2, 32], strides = [1, 1]} : vector<2x128xf32> to vector<2x32xf32>
    %396 = vector.extract_strided_slice %386 {offsets = [0, 32], sizes = [2, 32], strides = [1, 1]} : vector<2x128xf32> to vector<2x32xf32>
    %397 = arith.addf %395, %396 : vector<2x32xf32>
    %398 = arith.negf %397 : vector<2x32xf32>
    %399 = math.exp %398 : vector<2x32xf32>
    %cst_103 = arith.constant 1.000000e+00 : f32
    %400 = vector.broadcast %cst_103 : f32 to vector<2x32xf32>
    %401 = arith.addf %400, %399 : vector<2x32xf32>
    %402 = arith.divf %400, %401 : vector<2x32xf32>
    %403 = vector.extract_strided_slice %385 {offsets = [0, 64], sizes = [2, 32], strides = [1, 1]} : vector<2x128xf32> to vector<2x32xf32>
    %404 = vector.extract_strided_slice %386 {offsets = [0, 64], sizes = [2, 32], strides = [1, 1]} : vector<2x128xf32> to vector<2x32xf32>
    %405 = arith.addf %404, %248 : vector<2x32xf32>
    %406 = arith.mulf %394, %405 : vector<2x32xf32>
    %407 = arith.addf %403, %406 : vector<2x32xf32>
    %408 = math.tanh %407 : vector<2x32xf32>
    %409 = arith.subf %384, %408 : vector<2x32xf32>
    %410 = arith.mulf %402, %409 : vector<2x32xf32>
    %411 = arith.addf %408, %410 : vector<2x32xf32>
    %c12_104 = arith.constant 12 : index
    %c0_105 = arith.constant 0 : index
    %412 = vector.load %arg12[%c12_104, %c0_105] : memref<16x128xf32, #tpu.memory_space<vmem>>, vector<2x128xf32>
    %cst_106 = arith.constant dense<0.000000e+00> : vector<2x128xf32>
    %413 = tpu.matmul %411, %245, %cst_106 {dimension_numbers = #tpu.dot_dimension_numbers<[1], [0], [0], [1], [0, 0, 1, 1], [], []>} : vector<2x32xf32>, vector<32x128xf32>, vector<2x128xf32> -> vector<2x128xf32>
    %414 = vector.extract_strided_slice %412 {offsets = [0, 0], sizes = [2, 32], strides = [1, 1]} : vector<2x128xf32> to vector<2x32xf32>
    %415 = vector.extract_strided_slice %413 {offsets = [0, 0], sizes = [2, 32], strides = [1, 1]} : vector<2x128xf32> to vector<2x32xf32>
    %416 = arith.addf %414, %415 : vector<2x32xf32>
    %417 = arith.negf %416 : vector<2x32xf32>
    %418 = math.exp %417 : vector<2x32xf32>
    %cst_107 = arith.constant 1.000000e+00 : f32
    %419 = vector.broadcast %cst_107 : f32 to vector<2x32xf32>
    %420 = arith.addf %419, %418 : vector<2x32xf32>
    %421 = arith.divf %419, %420 : vector<2x32xf32>
    %422 = vector.extract_strided_slice %412 {offsets = [0, 32], sizes = [2, 32], strides = [1, 1]} : vector<2x128xf32> to vector<2x32xf32>
    %423 = vector.extract_strided_slice %413 {offsets = [0, 32], sizes = [2, 32], strides = [1, 1]} : vector<2x128xf32> to vector<2x32xf32>
    %424 = arith.addf %422, %423 : vector<2x32xf32>
    %425 = arith.negf %424 : vector<2x32xf32>
    %426 = math.exp %425 : vector<2x32xf32>
    %cst_108 = arith.constant 1.000000e+00 : f32
    %427 = vector.broadcast %cst_108 : f32 to vector<2x32xf32>
    %428 = arith.addf %427, %426 : vector<2x32xf32>
    %429 = arith.divf %427, %428 : vector<2x32xf32>
    %430 = vector.extract_strided_slice %412 {offsets = [0, 64], sizes = [2, 32], strides = [1, 1]} : vector<2x128xf32> to vector<2x32xf32>
    %431 = vector.extract_strided_slice %413 {offsets = [0, 64], sizes = [2, 32], strides = [1, 1]} : vector<2x128xf32> to vector<2x32xf32>
    %432 = arith.addf %431, %248 : vector<2x32xf32>
    %433 = arith.mulf %421, %432 : vector<2x32xf32>
    %434 = arith.addf %430, %433 : vector<2x32xf32>
    %435 = math.tanh %434 : vector<2x32xf32>
    %436 = arith.subf %411, %435 : vector<2x32xf32>
    %437 = arith.mulf %429, %436 : vector<2x32xf32>
    %438 = arith.addf %435, %437 : vector<2x32xf32>
    %c14_109 = arith.constant 14 : index
    %c0_110 = arith.constant 0 : index
    %439 = vector.load %arg12[%c14_109, %c0_110] : memref<16x128xf32, #tpu.memory_space<vmem>>, vector<2x128xf32>
    %cst_111 = arith.constant dense<0.000000e+00> : vector<2x128xf32>
    %440 = tpu.matmul %438, %245, %cst_111 {dimension_numbers = #tpu.dot_dimension_numbers<[1], [0], [0], [1], [0, 0, 1, 1], [], []>} : vector<2x32xf32>, vector<32x128xf32>, vector<2x128xf32> -> vector<2x128xf32>
    %441 = vector.extract_strided_slice %439 {offsets = [0, 0], sizes = [2, 32], strides = [1, 1]} : vector<2x128xf32> to vector<2x32xf32>
    %442 = vector.extract_strided_slice %440 {offsets = [0, 0], sizes = [2, 32], strides = [1, 1]} : vector<2x128xf32> to vector<2x32xf32>
    %443 = arith.addf %441, %442 : vector<2x32xf32>
    %444 = arith.negf %443 : vector<2x32xf32>
    %445 = math.exp %444 : vector<2x32xf32>
    %cst_112 = arith.constant 1.000000e+00 : f32
    %446 = vector.broadcast %cst_112 : f32 to vector<2x32xf32>
    %447 = arith.addf %446, %445 : vector<2x32xf32>
    %448 = arith.divf %446, %447 : vector<2x32xf32>
    %449 = vector.extract_strided_slice %439 {offsets = [0, 32], sizes = [2, 32], strides = [1, 1]} : vector<2x128xf32> to vector<2x32xf32>
    %450 = vector.extract_strided_slice %440 {offsets = [0, 32], sizes = [2, 32], strides = [1, 1]} : vector<2x128xf32> to vector<2x32xf32>
    %451 = arith.addf %449, %450 : vector<2x32xf32>
    %452 = arith.negf %451 : vector<2x32xf32>
    %453 = math.exp %452 : vector<2x32xf32>
    %cst_113 = arith.constant 1.000000e+00 : f32
    %454 = vector.broadcast %cst_113 : f32 to vector<2x32xf32>
    %455 = arith.addf %454, %453 : vector<2x32xf32>
    %456 = arith.divf %454, %455 : vector<2x32xf32>
    %457 = vector.extract_strided_slice %439 {offsets = [0, 64], sizes = [2, 32], strides = [1, 1]} : vector<2x128xf32> to vector<2x32xf32>
    %458 = vector.extract_strided_slice %440 {offsets = [0, 64], sizes = [2, 32], strides = [1, 1]} : vector<2x128xf32> to vector<2x32xf32>
    %459 = arith.addf %458, %248 : vector<2x32xf32>
    %460 = arith.mulf %448, %459 : vector<2x32xf32>
    %461 = arith.addf %457, %460 : vector<2x32xf32>
    %462 = math.tanh %461 : vector<2x32xf32>
    %463 = arith.subf %438, %462 : vector<2x32xf32>
    %464 = arith.mulf %456, %463 : vector<2x32xf32>
    %465 = arith.addf %462, %464 : vector<2x32xf32>
    %c0_114 = arith.constant 0 : index
    %c0_115 = arith.constant 0 : index
    %466 = vector.load %arg9[%c0_114, %c0_115] : memref<32x128xf32, #tpu.memory_space<vmem>>, vector<32x128xf32>
    %cst_116 = arith.constant dense<0.000000e+00> : vector<2x128xf32>
    %467 = tpu.matmul %465, %466, %cst_116 {dimension_numbers = #tpu.dot_dimension_numbers<[1], [0], [0], [1], [0, 0, 1, 1], [], []>} : vector<2x32xf32>, vector<32x128xf32>, vector<2x128xf32> -> vector<2x128xf32>
    %c0_117 = arith.constant 0 : index
    %c0_118 = arith.constant 0 : index
    %468 = vector.load %arg10[%c0_117, %c0_118] : memref<1x128xf32, #tpu.memory_space<vmem>>, vector<1x128xf32>
    %469 = vector.broadcast %468 : vector<1x128xf32> to vector<2x128xf32>
    %470 = arith.addf %467, %469 : vector<2x128xf32>
    %c0_119 = arith.constant 0 : index
    %c0_120 = arith.constant 0 : index
    %471 = vector.load %arg11[%c0_119, %c0_120] : memref<2x128xf32, #tpu.memory_space<vmem>>, vector<2x128xf32>
    tpu.vector_store %arg11[%c0_119, %c0_120], %470 {strides = array<i32>} : memref<2x128xf32, #tpu.memory_space<vmem>>, vector<2x128xf32>,
    return
  }
}

</mosaic_0001>

<llo_original>
// kernel: gru_forward.1
$region0: #{gru_forward.1}
  #allocation0 [shape = 'u32[]', space=smem, size = 0x4, offset = 0x4, fixed_abs, tag = 'smem constant byte address 0x4 - core index']
  #allocation1 [shape = 'u32[72,128]{1,0:T(1,128)}', space=vmem, size = 0x9000, scoped, tag = 'internal scratch']
  #allocation2 [shape = 'f32[16,128]{1,0:T(8,128)}', space=vmem, size = 0x2000, scoped, tag = 'scratch operand']
  #allocation3 [shape = 'f32[16,32]{1,0:T(8,128)}', space=vmem, size = 0x2000, scoped, tag = 'scratch operand']
  %s0 = inlined_call_operand.vmem [shape: f32[16,1], index: 0, kind: input, shape index: {}]
  %s1 = inlined_call_operand.vmem [shape: f32[1,128], index: 1, kind: input, shape index: {}]
  %s2 = inlined_call_operand.vmem [shape: f32[32,128], index: 2, kind: input, shape index: {}]
  %s3 = inlined_call_operand.vmem [shape: f32[1,128], index: 3, kind: input, shape index: {}]
  %s4 = inlined_call_operand.vmem [shape: f32[1,32], index: 4, kind: input, shape index: {}]
  %s5 = inlined_call_operand.vmem [shape: f32[32,128], index: 5, kind: input, shape index: {}]
  %s6 = inlined_call_operand.vmem [shape: f32[32,128], index: 6, kind: input, shape index: {}]
  %s7 = inlined_call_operand.vmem [shape: f32[1,128], index: 7, kind: input, shape index: {}]
  %s8 = inlined_call_operand.vmem [shape: f32[1,32], index: 8, kind: input, shape index: {}]
  %s9 = inlined_call_operand.vmem [shape: f32[32,128], index: 9, kind: input, shape index: {}]
  %s10 = inlined_call_operand.vmem [shape: f32[1,128], index: 10, kind: input, shape index: {}]
  %s11 = inlined_call_operand.vmem [shape: f32[2,128], index: 11, kind: output, shape index: {}]
  %s12 = sld [smem:[#allocation0]]
  $region54: #{gru_forward.1} parent=0
    _
  %s14 = ssub.s32 1, %s12
  %s15 = scalar_select 0, %s14, %s12
  // Predicated region
  $region2: #{gru_forward.1} parent=0 // pred_check
    _
  $region3: #{gru_forward.1} parent=0 // pred_check_branch
    %17 = sbr.rel (0) target = $region5
  $region4: #{gru_forward.1} parent=0 // pred_region
    _
  $region5: #{gru_forward.1} parent=0 // pred_fallthru
    _
  // Predicated region
  $region6: #{gru_forward.1} parent=0 // pred_check
    _
  $region7: #{gru_forward.1} parent=0 // pred_check_branch
    %19 = sbr.rel (0) target = $region9
  $region8: #{gru_forward.1} parent=0 // pred_region
    _
  $region9: #{gru_forward.1} parent=0 // pred_fallthru
    _
  // Predicated region
  $region10: #{gru_forward.1} parent=0 // pred_check
    _
  $region11: #{gru_forward.1} parent=0 // pred_check_branch
    %21 = sbr.rel (0) target = $region13
  $region12: #{gru_forward.1} parent=0 // pred_region
    _
  $region13: #{gru_forward.1} parent=0 // pred_fallthru
    _
  // Predicated region
  $region14: #{gru_forward.1} parent=0 // pred_check
    _
  $region15: #{gru_forward.1} parent=0 // pred_check_branch
    %23 = sbr.rel (0) target = $region17
  $region16: #{gru_forward.1} parent=0 // pred_region
    _
  $region17: #{gru_forward.1} parent=0 // pred_fallthru
    _
  // Predicated region
  $region18: #{gru_forward.1} parent=0 // pred_check
    _
  $region19: #{gru_forward.1} parent=0 // pred_check_branch
    %25 = sbr.rel (0) target = $region21
  $region20: #{gru_forward.1} parent=0 // pred_region
    _
  $region21: #{gru_forward.1} parent=0 // pred_fallthru
    _
  // Predicated region
  $region22: #{gru_forward.1} parent=0 // pred_check
    _
  $region23: #{gru_forward.1} parent=0 // pred_check_branch
    %27 = sbr.rel (0) target = $region25
  $region24: #{gru_forward.1} parent=0 // pred_region
    _
  $region25: #{gru_forward.1} parent=0 // pred_fallthru
    _
  // Predicated region
  $region26: #{gru_forward.1} parent=0 // pred_check
    _
  $region27: #{gru_forward.1} parent=0 // pred_check_branch
    %29 = sbr.rel (0) target = $region29
  $region28: #{gru_forward.1} parent=0 // pred_region
    _
  $region29: #{gru_forward.1} parent=0 // pred_fallthru
    _
  // Predicated region
  $region30: #{gru_forward.1} parent=0 // pred_check
    _
  $region31: #{gru_forward.1} parent=0 // pred_check_branch
    %31 = sbr.rel (0) target = $region33
  $region32: #{gru_forward.1} parent=0 // pred_region
    _
  $region33: #{gru_forward.1} parent=0 // pred_fallthru
    _
  // Predicated region
  $region34: #{gru_forward.1} parent=0 // pred_check
    _
  $region35: #{gru_forward.1} parent=0 // pred_check_branch
    %33 = sbr.rel (0) target = $region37
  $region36: #{gru_forward.1} parent=0 // pred_region
    _
  $region37: #{gru_forward.1} parent=0 // pred_fallthru
    _
  // Predicated region
  $region38: #{gru_forward.1} parent=0 // pred_check
    _
  $region39: #{gru_forward.1} parent=0 // pred_check_branch
    %35 = sbr.rel (0) target = $region41
  $region40: #{gru_forward.1} parent=0 // pred_region
    _
  $region41: #{gru_forward.1} parent=0 // pred_fallthru
    _
  // Predicated region
  $region42: #{gru_forward.1} parent=0 // pred_check
    _
  $region43: #{gru_forward.1} parent=0 // pred_check_branch
    %37 = sbr.rel (0) target = $region45
  $region44: #{gru_forward.1} parent=0 // pred_region
    _
  $region45: #{gru_forward.1} parent=0 // pred_fallthru
    _
  %v38 = vld [vmem:[%s0] sm:$0xff]
  %v39 = vld [vmem:[%s0 + $0x8] sm:$0xff]
  %v40 = vld [vmem:[%s1] sm:$0x1]
  %42 = vset.pattern.permute.xlu0 0
  %43 = vperm.xlu0 %42, %v38
  %v44 = vpop.permute.xlu0 %43
  %47 = vset.pattern.permute.xlu0 0
  %48 = vperm.xlu0 %47, %v39
  %v49 = vpop.permute.xlu0 %48
  %v52 = vperm.slane %v40, 0
  %v54 = vmul.f32 %v44, %v52
  %v55 = vmul.f32 %v49, %v52
  %v56 = vld [vmem:[%s3] sm:$0x1]
  %v58 = vperm.slane %v56, 0
  %v60 = vadd.f32 %v54, %v58
  %v61 = vadd.f32 %v55, %v58
  %62 = vst [vmem:[#allocation2] sm:$0xff] %v60
  %63 = vst [vmem:[#allocation2 + $0x8] sm:$0xff] %v61
  %v64 = vld [vmem:[%s2] sm:$0xff]
  %v65 = vld [vmem:[%s2 + $0x8] sm:$0xff]
  %v66 = vld [vmem:[%s2 + $0x10] sm:$0xff]
  %v67 = vld [vmem:[%s2 + $0x18] sm:$0xff]
  %v68 = vld [vmem:[%s4] sm:$0x1]
  %v70 = vperm.slane %v68, 0
  %v71 = vld [vmem:[#allocation2] sm:$0x3]
  %vm72 = vcmask 261120
  %v74 = vsel %vm72, 0.0, 0
  %76 = vmatpush.msra.mxu0 0.0
  %77 = vmatpush.msra.mxu0 0.0
  %78 = vmatpush.msra.mxu0 0.0
  %79 = vmatpush.msra.mxu0 0.0
  %80 = vmatpush.msra.mxu0 0.0
  %81 = vmatpush.msra.mxu0 0.0
  %82 = vmatpush.msra.mxu0 0.0
  %83 = vmatpush.msra.mxu0 0.0
  %84 = vmatpush.msra.mxu0 0.0
  %85 = vmatpush.msra.mxu0 0.0
  %86 = vmatpush.msra.mxu0 0.0
  %87 = vmatpush.msra.mxu0 0.0
  %88 = vmatpush.msra.mxu0 %v67
  %89 = vmatpush.msra.mxu0 %v66
  %90 = vmatpush.msra.mxu0 %v65
  %91 = vmatpush.msra.mxu0 %v64
  %92 = vmatmul.f32.gmra.mxu0 %v74
  %v93 = vpop.f32.mrf.mxu0
  %v94 = vadd.f32 0.0, %v93
  %95 = vdwg.mxu0
  %v96 = vadd.f32 %v71, %v94
  %v97 = vxor.u32 %v96, 2147483648
  %v98 = vmul.f32 %v97, 1.442695
  %v99 = vpow.pop %v98
  %v100 = vadd.f32 %v99, 1.0
  %v101 = vrcp.pop %v100
  %v102 = vmul.f32 %v100, %v101
  %v103 = vsub.f32 1.0, %v102
  %v104 = vmul.f32 %v101, %v103
  %v105 = vadd.f32 %v101, %v104
  %vm106 = vweird.f32 %v100
  %vm107 = vweird.f32 %v101
  %vm108 = vmor %vm106, %vm107
  %v109 = vsel %vm108, %v101, %v105
  %v110 = vand.u32 2147483647, %v100
  %vm111 = vcmp.eq.f32.partialorder %v110, 8.507059e+37
  %v112 = vand.u32 %v100, 2147483648
  %v113 = vor.u32 1.1754944e-38, %v112
  %v114 = vsel %vm111, %v113, %v109
  %v115 = vmul.f32 1.0, %v114
  %116 = vrot.lane.b32.xlu0 %v70, 64
  %v117 = vpop.permute.xlu0 %116
  %v119 = vadd.f32 %v94, %v117
  %121 = vrot.lane.b32.xlu0 %v119, 64
  %v122 = vpop.permute.xlu0 %121
  %v124 = vmul.f32 %v115, %v122
  %126 = vrot.lane.b32.xlu0 %v124, 64
  %v127 = vpop.permute.xlu0 %126
  %v129 = vadd.f32 %v71, %v127
  %v130 = vtanh.pop %v129
  %v131 = vsub.f32 0.0, %v130
  %133 = vrot.lane.b32.xlu0 %v131, 96
  %v134 = vpop.permute.xlu0 %133
  %v136 = vmul.f32 %v115, %v134
  %138 = vrot.lane.b32.xlu0 %v136, 32
  %v139 = vpop.permute.xlu0 %138
  %v141 = vadd.f32 %v130, %v139
  %143 = vrot.lane.b32.xlu0 %v141, 64
  %v144 = vpop.permute.xlu0 %143
  %vm146 = vcmask 254976
  %147 = vst.msk [vmem:[#allocation3] sm:$0x3] %vm146, %v144
  %v148 = vld [vmem:[#allocation2 + $0x2] sm:$0x3]
  %v149 = vsel %vm72, %v144, 0
  %151 = vmatpush.msra.mxu0 0.0
  %152 = vmatpush.msra.mxu0 0.0
  %153 = vmatpush.msra.mxu0 0.0
  %154 = vmatpush.msra.mxu0 0.0
  %155 = vmatpush.msra.mxu0 0.0
  %156 = vmatpush.msra.mxu0 0.0
  %157 = vmatpush.msra.mxu0 0.0
  %158 = vmatpush.msra.mxu0 0.0
  %159 = vmatpush.msra.mxu0 0.0
  %160 = vmatpush.msra.mxu0 0.0
  %161 = vmatpush.msra.mxu0 0.0
  %162 = vmatpush.msra.mxu0 0.0
  %163 = vmatpush.msra.mxu0 %v67
  %164 = vmatpush.msra.mxu0 %v66
  %165 = vmatpush.msra.mxu0 %v65
  %166 = vmatpush.msra.mxu0 %v64
  %167 = vmatmul.f32.gmra.mxu0 %v149
  %v168 = vpop.f32.mrf.mxu0
  %v169 = vadd.f32 0.0, %v168
  %170 = vdwg.mxu0
  %v171 = vadd.f32 %v148, %v169
  %v172 = vxor.u32 %v171, 2147483648
  %v173 = vmul.f32 %v172, 1.442695
  %v174 = vpow.pop %v173
  %v175 = vadd.f32 %v174, 1.0
  %v176 = vrcp.pop %v175
  %v177 = vmul.f32 %v175, %v176
  %v178 = vsub.f32 1.0, %v177
  %v179 = vmul.f32 %v176, %v178
  %v180 = vadd.f32 %v176, %v179
  %vm181 = vweird.f32 %v175
  %vm182 = vweird.f32 %v176
  %vm183 = vmor %vm181, %vm182
  %v184 = vsel %vm183, %v176, %v180
  %v185 = vand.u32 2147483647, %v175
  %vm186 = vcmp.eq.f32.partialorder %v185, 8.507059e+37
  %v187 = vand.u32 %v175, 2147483648
  %v188 = vor.u32 1.1754944e-38, %v187
  %v189 = vsel %vm186, %v188, %v184
  %v190 = vmul.f32 1.0, %v189
  %v191 = vadd.f32 %v169, %v117
  %193 = vrot.lane.b32.xlu0 %v191, 64
  %v194 = vpop.permute.xlu0 %193
  %v196 = vmul.f32 %v190, %v194
  %198 = vrot.lane.b32.xlu0 %v196, 64
  %v199 = vpop.permute.xlu0 %198
  %v201 = vadd.f32 %v148, %v199
  %v202 = vtanh.pop %v201
  %v203 = vsub.f32 %v141, %v202
  %205 = vrot.lane.b32.xlu0 %v203, 96
  %v206 = vpop.permute.xlu0 %205
  %v208 = vmul.f32 %v190, %v206
  %210 = vrot.lane.b32.xlu0 %v208, 32
  %v211 = vpop.permute.xlu0 %210
  %v213 = vadd.f32 %v202, %v211
  %215 = vrot.lane.b32.xlu0 %v213, 64
  %v216 = vpop.permute.xlu0 %215
  %218 = vst.msk [vmem:[#allocation3 + $0x2] sm:$0x3] %vm146, %v216
  %v219 = vld [vmem:[#allocation2 + $0x4] sm:$0x3]
  %v220 = vsel %vm72, %v216, 0
  %222 = vmatpush.msra.mxu0 0.0
  %223 = vmatpush.msra.mxu0 0.0
  %224 = vmatpush.msra.mxu0 0.0
  %225 = vmatpush.msra.mxu0 0.0
  %226 = vmatpush.msra.mxu0 0.0
  %227 = vmatpush.msra.mxu0 0.0
  %228 = vmatpush.msra.mxu0 0.0
  %229 = vmatpush.msra.mxu0 0.0
  %230 = vmatpush.msra.mxu0 0.0
  %231 = vmatpush.msra.mxu0 0.0
  %232 = vmatpush.msra.mxu0 0.0
  %233 = vmatpush.msra.mxu0 0.0
  %234 = vmatpush.msra.mxu0 %v67
  %235 = vmatpush.msra.mxu0 %v66
  %236 = vmatpush.msra.mxu0 %v65
  %237 = vmatpush.msra.mxu0 %v64
  %238 = vmatmul.f32.gmra.mxu0 %v220
  %v239 = vpop.f32.mrf.mxu0
  %v240 = vadd.f32 0.0, %v239
  %241 = vdwg.mxu0
  %v242 = vadd.f32 %v219, %v240
  %v243 = vxor.u32 %v242, 2147483648
  %v244 = vmul.f32 %v243, 1.442695
  %v245 = vpow.pop %v244
  %v246 = vadd.f32 %v245, 1.0
  %v247 = vrcp.pop %v246
  %v248 = vmul.f32 %v246, %v247
  %v249 = vsub.f32 1.0, %v248
  %v250 = vmul.f32 %v247, %v249
  %v251 = vadd.f32 %v247, %v250
  %vm252 = vweird.f32 %v246
  %vm253 = vweird.f32 %v247
  %vm254 = vmor %vm252, %vm253
  %v255 = vsel %vm254, %v247, %v251
  %v256 = vand.u32 2147483647, %v246
  %vm257 = vcmp.eq.f32.partialorder %v256, 8.507059e+37
  %v258 = vand.u32 %v246, 2147483648
  %v259 = vor.u32 1.1754944e-38, %v258
  %v260 = vsel %vm257, %v259, %v255
  %v261 = vmul.f32 1.0, %v260
  %v262 = vadd.f32 %v240, %v117
  %264 = vrot.lane.b32.xlu0 %v262, 64
  %v265 = vpop.permute.xlu0 %264
  %v267 = vmul.f32 %v261, %v265
  %269 = vrot.lane.b32.xlu0 %v267, 64
  %v270 = vpop.permute.xlu0 %269
  %v272 = vadd.f32 %v219, %v270
  %v273 = vtanh.pop %v272
  %v274 = vsub.f32 %v213, %v273
  %276 = vrot.lane.b32.xlu0 %v274, 96
  %v277 = vpop.permute.xlu0 %276
  %v279 = vmul.f32 %v261, %v277
  %281 = vrot.lane.b32.xlu0 %v279, 32
  %v282 = vpop.permute.xlu0 %281
  %v284 = vadd.f32 %v273, %v282
  %286 = vrot.lane.b32.xlu0 %v284, 64
  %v287 = vpop.permute.xlu0 %286
  %289 = vst.msk [vmem:[#allocation3 + $0x4] sm:$0x3] %vm146, %v287
  %v290 = vld [vmem:[#allocation2 + $0x6] sm:$0x3]
  %v291 = vsel %vm72, %v287, 0
  %293 = vmatpush.msra.mxu0 0.0
  %294 = vmatpush.msra.mxu0 0.0
  %295 = vmatpush.msra.mxu0 0.0
  %296 = vmatpush.msra.mxu0 0.0
  %297 = vmatpush.msra.mxu0 0.0
  %298 = vmatpush.msra.mxu0 0.0
  %299 = vmatpush.msra.mxu0 0.0
  %300 = vmatpush.msra.mxu0 0.0
  %301 = vmatpush.msra.mxu0 0.0
  %302 = vmatpush.msra.mxu0 0.0
  %303 = vmatpush.msra.mxu0 0.0
  %304 = vmatpush.msra.mxu0 0.0
  %305 = vmatpush.msra.mxu0 %v67
  %306 = vmatpush.msra.mxu0 %v66
  %307 = vmatpush.msra.mxu0 %v65
  %308 = vmatpush.msra.mxu0 %v64
  %309 = vmatmul.f32.gmra.mxu0 %v291
  %v310 = vpop.f32.mrf.mxu0
  %v311 = vadd.f32 0.0, %v310
  %312 = vdwg.mxu0
  %v313 = vadd.f32 %v290, %v311
  %v314 = vxor.u32 %v313, 2147483648
  %v315 = vmul.f32 %v314, 1.442695
  %v316 = vpow.pop %v315
  %v317 = vadd.f32 %v316, 1.0
  %v318 = vrcp.pop %v317
  %v319 = vmul.f32 %v317, %v318
  %v320 = vsub.f32 1.0, %v319
  %v321 = vmul.f32 %v318, %v320
  %v322 = vadd.f32 %v318, %v321
  %vm323 = vweird.f32 %v317
  %vm324 = vweird.f32 %v318
  %vm325 = vmor %vm323, %vm324
  %v326 = vsel %vm325, %v318, %v322
  %v327 = vand.u32 2147483647, %v317
  %vm328 = vcmp.eq.f32.partialorder %v327, 8.507059e+37
  %v329 = vand.u32 %v317, 2147483648
  %v330 = vor.u32 1.1754944e-38, %v329
  %v331 = vsel %vm328, %v330, %v326
  %v332 = vmul.f32 1.0, %v331
  %v333 = vadd.f32 %v311, %v117
  %335 = vrot.lane.b32.xlu0 %v333, 64
  %v336 = vpop.permute.xlu0 %335
  %v338 = vmul.f32 %v332, %v336
  %340 = vrot.lane.b32.xlu0 %v338, 64
  %v341 = vpop.permute.xlu0 %340
  %v343 = vadd.f32 %v290, %v341
  %v344 = vtanh.pop %v343
  %v345 = vsub.f32 %v284, %v344
  %347 = vrot.lane.b32.xlu0 %v345, 96
  %v348 = vpop.permute.xlu0 %347
  %v350 = vmul.f32 %v332, %v348
  %352 = vrot.lane.b32.xlu0 %v350, 32
  %v353 = vpop.permute.xlu0 %352
  %v355 = vadd.f32 %v344, %v353
  %357 = vrot.lane.b32.xlu0 %v355, 64
  %v358 = vpop.permute.xlu0 %357
  %360 = vst.msk [vmem:[#allocation3 + $0x6] sm:$0x3] %vm146, %v358
  %v361 = vld [vmem:[#allocation2 + $0x8] sm:$0x3]
  %v362 = vsel %vm72, %v358, 0
  %364 = vmatpush.msra.mxu0 0.0
  %365 = vmatpush.msra.mxu0 0.0
  %366 = vmatpush.msra.mxu0 0.0
  %367 = vmatpush.msra.mxu0 0.0
  %368 = vmatpush.msra.mxu0 0.0
  %369 = vmatpush.msra.mxu0 0.0
  %370 = vmatpush.msra.mxu0 0.0
  %371 = vmatpush.msra.mxu0 0.0
  %372 = vmatpush.msra.mxu0 0.0
  %373 = vmatpush.msra.mxu0 0.0
  %374 = vmatpush.msra.mxu0 0.0
  %375 = vmatpush.msra.mxu0 0.0
  %376 = vmatpush.msra.mxu0 %v67
  %377 = vmatpush.msra.mxu0 %v66
  %378 = vmatpush.msra.mxu0 %v65
  %379 = vmatpush.msra.mxu0 %v64
  %380 = vmatmul.f32.gmra.mxu0 %v362
  %v381 = vpop.f32.mrf.mxu0
  %v382 = vadd.f32 0.0, %v381
  %383 = vdwg.mxu0
  %v384 = vadd.f32 %v361, %v382
  %v385 = vxor.u32 %v384, 2147483648
  %v386 = vmul.f32 %v385, 1.442695
  %v387 = vpow.pop %v386
  %v388 = vadd.f32 %v387, 1.0
  %v389 = vrcp.pop %v388
  %v390 = vmul.f32 %v388, %v389
  %v391 = vsub.f32 1.0, %v390
  %v392 = vmul.f32 %v389, %v391
  %v393 = vadd.f32 %v389, %v392
  %vm394 = vweird.f32 %v388
  %vm395 = vweird.f32 %v389
  %vm396 = vmor %vm394, %vm395
  %v397 = vsel %vm396, %v389, %v393
  %v398 = vand.u32 2147483647, %v388
  %vm399 = vcmp.eq.f32.partialorder %v398, 8.507059e+37
  %v400 = vand.u32 %v388, 2147483648
  %v401 = vor.u32 1.1754944e-38, %v400
  %v402 = vsel %vm399, %v401, %v397
  %v403 = vmul.f32 1.0, %v402
  %v404 = vadd.f32 %v382, %v117
  %406 = vrot.lane.b32.xlu0 %v404, 64
  %v407 = vpop.permute.xlu0 %406
  %v409 = vmul.f32 %v403, %v407
  %411 = vrot.lane.b32.xlu0 %v409, 64
  %v412 = vpop.permute.xlu0 %411
  %v414 = vadd.f32 %v361, %v412
  %v415 = vtanh.pop %v414
  %v416 = vsub.f32 %v355, %v415
  %418 = vrot.lane.b32.xlu0 %v416, 96
  %v419 = vpop.permute.xlu0 %418
  %v421 = vmul.f32 %v403, %v419
  %423 = vrot.lane.b32.xlu0 %v421, 32
  %v424 = vpop.permute.xlu0 %423
  %v426 = vadd.f32 %v415, %v424
  %428 = vrot.lane.b32.xlu0 %v426, 64
  %v429 = vpop.permute.xlu0 %428
  %431 = vst.msk [vmem:[#allocation3 + $0x8] sm:$0x3] %vm146, %v429
  %v432 = vld [vmem:[#allocation2 + $0xa] sm:$0x3]
  %v433 = vsel %vm72, %v429, 0
  %435 = vmatpush.msra.mxu0 0.0
  %436 = vmatpush.msra.mxu0 0.0
  %437 = vmatpush.msra.mxu0 0.0
  %438 = vmatpush.msra.mxu0 0.0
  %439 = vmatpush.msra.mxu0 0.0
  %440 = vmatpush.msra.mxu0 0.0
  %441 = vmatpush.msra.mxu0 0.0
  %442 = vmatpush.msra.mxu0 0.0
  %443 = vmatpush.msra.mxu0 0.0
  %444 = vmatpush.msra.mxu0 0.0
  %445 = vmatpush.msra.mxu0 0.0
  %446 = vmatpush.msra.mxu0 0.0
  %447 = vmatpush.msra.mxu0 %v67
  %448 = vmatpush.msra.mxu0 %v66
  %449 = vmatpush.msra.mxu0 %v65
  %450 = vmatpush.msra.mxu0 %v64
  %451 = vmatmul.f32.gmra.mxu0 %v433
  %v452 = vpop.f32.mrf.mxu0
  %v453 = vadd.f32 0.0, %v452
  %454 = vdwg.mxu0
  %v455 = vadd.f32 %v432, %v453
  %v456 = vxor.u32 %v455, 2147483648
  %v457 = vmul.f32 %v456, 1.442695
  %v458 = vpow.pop %v457
  %v459 = vadd.f32 %v458, 1.0
  %v460 = vrcp.pop %v459
  %v461 = vmul.f32 %v459, %v460
  %v462 = vsub.f32 1.0, %v461
  %v463 = vmul.f32 %v460, %v462
  %v464 = vadd.f32 %v460, %v463
  %vm465 = vweird.f32 %v459
  %vm466 = vweird.f32 %v460
  %vm467 = vmor %vm465, %vm466
  %v468 = vsel %vm467, %v460, %v464
  %v469 = vand.u32 2147483647, %v459
  %vm470 = vcmp.eq.f32.partialorder %v469, 8.507059e+37
  %v471 = vand.u32 %v459, 2147483648
  %v472 = vor.u32 1.1754944e-38, %v471
  %v473 = vsel %vm470, %v472, %v468
  %v474 = vmul.f32 1.0, %v473
  %v475 = vadd.f32 %v453, %v117
  %477 = vrot.lane.b32.xlu0 %v475, 64
  %v478 = vpop.permute.xlu0 %477
  %v480 = vmul.f32 %v474, %v478
  %482 = vrot.lane.b32.xlu0 %v480, 64
  %v483 = vpop.permute.xlu0 %482
  %v485 = vadd.f32 %v432, %v483
  %v486 = vtanh.pop %v485
  %v487 = vsub.f32 %v426, %v486
  %489 = vrot.lane.b32.xlu0 %v487, 96
  %v490 = vpop.permute.xlu0 %489
  %v492 = vmul.f32 %v474, %v490
  %494 = vrot.lane.b32.xlu0 %v492, 32
  %v495 = vpop.permute.xlu0 %494
  %v497 = vadd.f32 %v486, %v495
  %499 = vrot.lane.b32.xlu0 %v497, 64
  %v500 = vpop.permute.xlu0 %499
  %502 = vst.msk [vmem:[#allocation3 + $0xa] sm:$0x3] %vm146, %v500
  %v503 = vld [vmem:[#allocation2 + $0xc] sm:$0x3]
  %v504 = vsel %vm72, %v500, 0
  %506 = vmatpush.msra.mxu0 0.0
  %507 = vmatpush.msra.mxu0 0.0
  %508 = vmatpush.msra.mxu0 0.0
  %509 = vmatpush.msra.mxu0 0.0
  %510 = vmatpush.msra.mxu0 0.0
  %511 = vmatpush.msra.mxu0 0.0
  %512 = vmatpush.msra.mxu0 0.0
  %513 = vmatpush.msra.mxu0 0.0
  %514 = vmatpush.msra.mxu0 0.0
  %515 = vmatpush.msra.mxu0 0.0
  %516 = vmatpush.msra.mxu0 0.0
  %517 = vmatpush.msra.mxu0 0.0
  %518 = vmatpush.msra.mxu0 %v67
  %519 = vmatpush.msra.mxu0 %v66
  %520 = vmatpush.msra.mxu0 %v65
  %521 = vmatpush.msra.mxu0 %v64
  %522 = vmatmul.f32.gmra.mxu0 %v504
  %v523 = vpop.f32.mrf.mxu0
  %v524 = vadd.f32 0.0, %v523
  %525 = vdwg.mxu0
  %v526 = vadd.f32 %v503, %v524
  %v527 = vxor.u32 %v526, 2147483648
  %v528 = vmul.f32 %v527, 1.442695
  %v529 = vpow.pop %v528
  %v530 = vadd.f32 %v529, 1.0
  %v531 = vrcp.pop %v530
  %v532 = vmul.f32 %v530, %v531
  %v533 = vsub.f32 1.0, %v532
  %v534 = vmul.f32 %v531, %v533
  %v535 = vadd.f32 %v531, %v534
  %vm536 = vweird.f32 %v530
  %vm537 = vweird.f32 %v531
  %vm538 = vmor %vm536, %vm537
  %v539 = vsel %vm538, %v531, %v535
  %v540 = vand.u32 2147483647, %v530
  %vm541 = vcmp.eq.f32.partialorder %v540, 8.507059e+37
  %v542 = vand.u32 %v530, 2147483648
  %v543 = vor.u32 1.1754944e-38, %v542
  %v544 = vsel %vm541, %v543, %v539
  %v545 = vmul.f32 1.0, %v544
  %v546 = vadd.f32 %v524, %v117
  %548 = vrot.lane.b32.xlu0 %v546, 64
  %v549 = vpop.permute.xlu0 %548
  %v551 = vmul.f32 %v545, %v549
  %553 = vrot.lane.b32.xlu0 %v551, 64
  %v554 = vpop.permute.xlu0 %553
  %v556 = vadd.f32 %v503, %v554
  %v557 = vtanh.pop %v556
  %v558 = vsub.f32 %v497, %v557
  %560 = vrot.lane.b32.xlu0 %v558, 96
  %v561 = vpop.permute.xlu0 %560
  %v563 = vmul.f32 %v545, %v561
  %565 = vrot.lane.b32.xlu0 %v563, 32
  %v566 = vpop.permute.xlu0 %565
  %v568 = vadd.f32 %v557, %v566
  %570 = vrot.lane.b32.xlu0 %v568, 64
  %v571 = vpop.permute.xlu0 %570
  %573 = vst.msk [vmem:[#allocation3 + $0xc] sm:$0x3] %vm146, %v571
  %v574 = vld [vmem:[#allocation2 + $0xe] sm:$0x3]
  %v575 = vsel %vm72, %v571, 0
  %577 = vmatpush.msra.mxu0 0.0
  %578 = vmatpush.msra.mxu0 0.0
  %579 = vmatpush.msra.mxu0 0.0
  %580 = vmatpush.msra.mxu0 0.0
  %581 = vmatpush.msra.mxu0 0.0
  %582 = vmatpush.msra.mxu0 0.0
  %583 = vmatpush.msra.mxu0 0.0
  %584 = vmatpush.msra.mxu0 0.0
  %585 = vmatpush.msra.mxu0 0.0
  %586 = vmatpush.msra.mxu0 0.0
  %587 = vmatpush.msra.mxu0 0.0
  %588 = vmatpush.msra.mxu0 0.0
  %589 = vmatpush.msra.mxu0 %v67
  %590 = vmatpush.msra.mxu0 %v66
  %591 = vmatpush.msra.mxu0 %v65
  %592 = vmatpush.msra.mxu0 %v64
  %593 = vmatmul.f32.gmra.mxu0 %v575
  %v594 = vpop.f32.mrf.mxu0
  %v595 = vadd.f32 0.0, %v594
  %596 = vdwg.mxu0
  %v597 = vadd.f32 %v574, %v595
  %v598 = vxor.u32 %v597, 2147483648
  %v599 = vmul.f32 %v598, 1.442695
  %v600 = vpow.pop %v599
  %v601 = vadd.f32 %v600, 1.0
  %v602 = vrcp.pop %v601
  %v603 = vmul.f32 %v601, %v602
  %v604 = vsub.f32 1.0, %v603
  %v605 = vmul.f32 %v602, %v604
  %v606 = vadd.f32 %v602, %v605
  %vm607 = vweird.f32 %v601
  %vm608 = vweird.f32 %v602
  %vm609 = vmor %vm607, %vm608
  %v610 = vsel %vm609, %v602, %v606
  %v611 = vand.u32 2147483647, %v601
  %vm612 = vcmp.eq.f32.partialorder %v611, 8.507059e+37
  %v613 = vand.u32 %v601, 2147483648
  %v614 = vor.u32 1.1754944e-38, %v613
  %v615 = vsel %vm612, %v614, %v610
  %v616 = vmul.f32 1.0, %v615
  %v617 = vadd.f32 %v595, %v117
  %619 = vrot.lane.b32.xlu0 %v617, 64
  %v620 = vpop.permute.xlu0 %619
  %v622 = vmul.f32 %v616, %v620
  %624 = vrot.lane.b32.xlu0 %v622, 64
  %v625 = vpop.permute.xlu0 %624
  %v627 = vadd.f32 %v574, %v625
  %v628 = vtanh.pop %v627
  %v629 = vsub.f32 %v568, %v628
  %631 = vrot.lane.b32.xlu0 %v629, 96
  %v632 = vpop.permute.xlu0 %631
  %v634 = vmul.f32 %v616, %v632
  %636 = vrot.lane.b32.xlu0 %v634, 32
  %v637 = vpop.permute.xlu0 %636
  %v639 = vadd.f32 %v628, %v637
  %641 = vrot.lane.b32.xlu0 %v639, 64
  %v642 = vpop.permute.xlu0 %641
  %644 = vst.msk [vmem:[#allocation3 + $0xe] sm:$0x3] %vm146, %v642
  %v645 = vld [vmem:[#allocation3] sm:$0xff]
  %v646 = vld [vmem:[#allocation3 + $0x8] sm:$0xff]
  %v647 = vld [vmem:[%s5] sm:$0xff]
  %v648 = vld [vmem:[%s5 + $0x8] sm:$0xff]
  %v649 = vld [vmem:[%s5 + $0x10] sm:$0xff]
  %v650 = vld [vmem:[%s5 + $0x18] sm:$0xff]
  %v651 = vld [vmem:[%s7] sm:$0x1]
  %v653 = vperm.slane %v651, 0
  %v656 = vsel %vm72, %v645, 0
  %v659 = vsel %vm72, %v646, 0
  %661 = vmatpush.msra.mxu0 0.0
  %662 = vmatpush.msra.mxu0 0.0
  %663 = vmatpush.msra.mxu0 0.0
  %664 = vmatpush.msra.mxu0 0.0
  %665 = vmatpush.msra.mxu0 0.0
  %666 = vmatpush.msra.mxu0 0.0
  %667 = vmatpush.msra.mxu0 0.0
  %668 = vmatpush.msra.mxu0 0.0
  %669 = vmatpush.msra.mxu0 0.0
  %670 = vmatpush.msra.mxu0 0.0
  %671 = vmatpush.msra.mxu0 0.0
  %672 = vmatpush.msra.mxu0 0.0
  %673 = vmatpush.msra.mxu0 %v650
  %674 = vmatpush.msra.mxu0 %v649
  %675 = vmatpush.msra.mxu0 %v648
  %676 = vmatpush.msra.mxu0 %v647
  %677 = vmatmul.f32.gmra.mxu0 %v656
  %v678 = vpop.f32.mrf.mxu0
  %v679 = vadd.f32 %v653, %v678
  %680 = vmatmul.f32.gmra.mxu0 %v659
  %v681 = vpop.f32.mrf.mxu0
  %v682 = vadd.f32 %v653, %v681
  %683 = vdwg.mxu0
  %684 = vst [vmem:[#allocation2] sm:$0xff] %v679
  %685 = vst [vmem:[#allocation2 + $0x8] sm:$0xff] %v682
  %v686 = vld [vmem:[%s6] sm:$0xff]
  %v687 = vld [vmem:[%s6 + $0x8] sm:$0xff]
  %v688 = vld [vmem:[%s6 + $0x10] sm:$0xff]
  %v689 = vld [vmem:[%s6 + $0x18] sm:$0xff]
  %v690 = vld [vmem:[%s8] sm:$0x1]
  %v692 = vperm.slane %v690, 0
  %v693 = vld [vmem:[#allocation2] sm:$0x3]
  %694 = vmatpush.msra.mxu0 0.0
  %695 = vmatpush.msra.mxu0 0.0
  %696 = vmatpush.msra.mxu0 0.0
  %697 = vmatpush.msra.mxu0 0.0
  %698 = vmatpush.msra.mxu0 0.0
  %699 = vmatpush.msra.mxu0 0.0
  %700 = vmatpush.msra.mxu0 0.0
  %701 = vmatpush.msra.mxu0 0.0
  %702 = vmatpush.msra.mxu0 0.0
  %703 = vmatpush.msra.mxu0 0.0
  %704 = vmatpush.msra.mxu0 0.0
  %705 = vmatpush.msra.mxu0 0.0
  %706 = vmatpush.msra.mxu0 %v689
  %707 = vmatpush.msra.mxu0 %v688
  %708 = vmatpush.msra.mxu0 %v687
  %709 = vmatpush.msra.mxu0 %v686
  %710 = vmatmul.f32.gmra.mxu0 %v74
  %v711 = vpop.f32.mrf.mxu0
  %v712 = vadd.f32 0.0, %v711
  %713 = vdwg.mxu0
  %v714 = vadd.f32 %v693, %v712
  %v715 = vxor.u32 %v714, 2147483648
  %v716 = vmul.f32 %v715, 1.442695
  %v717 = vpow.pop %v716
  %v718 = vadd.f32 %v717, 1.0
  %v719 = vrcp.pop %v718
  %v720 = vmul.f32 %v718, %v719
  %v721 = vsub.f32 1.0, %v720
  %v722 = vmul.f32 %v719, %v721
  %v723 = vadd.f32 %v719, %v722
  %vm724 = vweird.f32 %v718
  %vm725 = vweird.f32 %v719
  %vm726 = vmor %vm724, %vm725
  %v727 = vsel %vm726, %v719, %v723
  %v728 = vand.u32 2147483647, %v718
  %vm729 = vcmp.eq.f32.partialorder %v728, 8.507059e+37
  %v730 = vand.u32 %v718, 2147483648
  %v731 = vor.u32 1.1754944e-38, %v730
  %v732 = vsel %vm729, %v731, %v727
  %v733 = vmul.f32 1.0, %v732
  %734 = vrot.lane.b32.xlu0 %v692, 64
  %v735 = vpop.permute.xlu0 %734
  %v737 = vadd.f32 %v712, %v735
  %739 = vrot.lane.b32.xlu0 %v737, 64
  %v740 = vpop.permute.xlu0 %739
  %v742 = vmul.f32 %v733, %v740
  %744 = vrot.lane.b32.xlu0 %v742, 64
  %v745 = vpop.permute.xlu0 %744
  %v747 = vadd.f32 %v693, %v745
  %v748 = vtanh.pop %v747
  %v749 = vsub.f32 0.0, %v748
  %751 = vrot.lane.b32.xlu0 %v749, 96
  %v752 = vpop.permute.xlu0 %751
  %v754 = vmul.f32 %v733, %v752
  %756 = vrot.lane.b32.xlu0 %v754, 32
  %v757 = vpop.permute.xlu0 %756
  %v759 = vadd.f32 %v748, %v757
  %v760 = vld [vmem:[#allocation2 + $0x2] sm:$0x3]
  %762 = vrot.lane.b32.xlu0 %v759, 64
  %v763 = vpop.permute.xlu0 %762
  %v764 = vsel %vm72, %v763, 0
  %766 = vmatpush.msra.mxu0 0.0
  %767 = vmatpush.msra.mxu0 0.0
  %768 = vmatpush.msra.mxu0 0.0
  %769 = vmatpush.msra.mxu0 0.0
  %770 = vmatpush.msra.mxu0 0.0
  %771 = vmatpush.msra.mxu0 0.0
  %772 = vmatpush.msra.mxu0 0.0
  %773 = vmatpush.msra.mxu0 0.0
  %774 = vmatpush.msra.mxu0 0.0
  %775 = vmatpush.msra.mxu0 0.0
  %776 = vmatpush.msra.mxu0 0.0
  %777 = vmatpush.msra.mxu0 0.0
  %778 = vmatpush.msra.mxu0 %v689
  %779 = vmatpush.msra.mxu0 %v688
  %780 = vmatpush.msra.mxu0 %v687
  %781 = vmatpush.msra.mxu0 %v686
  %782 = vmatmul.f32.gmra.mxu0 %v764
  %v783 = vpop.f32.mrf.mxu0
  %v784 = vadd.f32 0.0, %v783
  %785 = vdwg.mxu0
  %v786 = vadd.f32 %v760, %v784
  %v787 = vxor.u32 %v786, 2147483648
  %v788 = vmul.f32 %v787, 1.442695
  %v789 = vpow.pop %v788
  %v790 = vadd.f32 %v789, 1.0
  %v791 = vrcp.pop %v790
  %v792 = vmul.f32 %v790, %v791
  %v793 = vsub.f32 1.0, %v792
  %v794 = vmul.f32 %v791, %v793
  %v795 = vadd.f32 %v791, %v794
  %vm796 = vweird.f32 %v790
  %vm797 = vweird.f32 %v791
  %vm798 = vmor %vm796, %vm797
  %v799 = vsel %vm798, %v791, %v795
  %v800 = vand.u32 2147483647, %v790
  %vm801 = vcmp.eq.f32.partialorder %v800, 8.507059e+37
  %v802 = vand.u32 %v790, 2147483648
  %v803 = vor.u32 1.1754944e-38, %v802
  %v804 = vsel %vm801, %v803, %v799
  %v805 = vmul.f32 1.0, %v804
  %v806 = vadd.f32 %v784, %v735
  %808 = vrot.lane.b32.xlu0 %v806, 64
  %v809 = vpop.permute.xlu0 %808
  %v811 = vmul.f32 %v805, %v809
  %813 = vrot.lane.b32.xlu0 %v811, 64
  %v814 = vpop.permute.xlu0 %813
  %v816 = vadd.f32 %v760, %v814
  %v817 = vtanh.pop %v816
  %v818 = vsub.f32 %v759, %v817
  %820 = vrot.lane.b32.xlu0 %v818, 96
  %v821 = vpop.permute.xlu0 %820
  %v823 = vmul.f32 %v805, %v821
  %825 = vrot.lane.b32.xlu0 %v823, 32
  %v826 = vpop.permute.xlu0 %825
  %v828 = vadd.f32 %v817, %v826
  %v829 = vld [vmem:[#allocation2 + $0x4] sm:$0x3]
  %831 = vrot.lane.b32.xlu0 %v828, 64
  %v832 = vpop.permute.xlu0 %831
  %v833 = vsel %vm72, %v832, 0
  %835 = vmatpush.msra.mxu0 0.0
  %836 = vmatpush.msra.mxu0 0.0
  %837 = vmatpush.msra.mxu0 0.0
  %838 = vmatpush.msra.mxu0 0.0
  %839 = vmatpush.msra.mxu0 0.0
  %840 = vmatpush.msra.mxu0 0.0
  %841 = vmatpush.msra.mxu0 0.0
  %842 = vmatpush.msra.mxu0 0.0
  %843 = vmatpush.msra.mxu0 0.0
  %844 = vmatpush.msra.mxu0 0.0
  %845 = vmatpush.msra.mxu0 0.0
  %846 = vmatpush.msra.mxu0 0.0
  %847 = vmatpush.msra.mxu0 %v689
  %848 = vmatpush.msra.mxu0 %v688
  %849 = vmatpush.msra.mxu0 %v687
  %850 = vmatpush.msra.mxu0 %v686
  %851 = vmatmul.f32.gmra.mxu0 %v833
  %v852 = vpop.f32.mrf.mxu0
  %v853 = vadd.f32 0.0, %v852
  %854 = vdwg.mxu0
  %v855 = vadd.f32 %v829, %v853
  %v856 = vxor.u32 %v855, 2147483648
  %v857 = vmul.f32 %v856, 1.442695
  %v858 = vpow.pop %v857
  %v859 = vadd.f32 %v858, 1.0
  %v860 = vrcp.pop %v859
  %v861 = vmul.f32 %v859, %v860
  %v862 = vsub.f32 1.0, %v861
  %v863 = vmul.f32 %v860, %v862
  %v864 = vadd.f32 %v860, %v863
  %vm865 = vweird.f32 %v859
  %vm866 = vweird.f32 %v860
  %vm867 = vmor %vm865, %vm866
  %v868 = vsel %vm867, %v860, %v864
  %v869 = vand.u32 2147483647, %v859
  %vm870 = vcmp.eq.f32.partialorder %v869, 8.507059e+37
  %v871 = vand.u32 %v859, 2147483648
  %v872 = vor.u32 1.1754944e-38, %v871
  %v873 = vsel %vm870, %v872, %v868
  %v874 = vmul.f32 1.0, %v873
  %v875 = vadd.f32 %v853, %v735
  %877 = vrot.lane.b32.xlu0 %v875, 64
  %v878 = vpop.permute.xlu0 %877
  %v880 = vmul.f32 %v874, %v878
  %882 = vrot.lane.b32.xlu0 %v880, 64
  %v883 = vpop.permute.xlu0 %882
  %v885 = vadd.f32 %v829, %v883
  %v886 = vtanh.pop %v885
  %v887 = vsub.f32 %v828, %v886
  %889 = vrot.lane.b32.xlu0 %v887, 96
  %v890 = vpop.permute.xlu0 %889
  %v892 = vmul.f32 %v874, %v890
  %894 = vrot.lane.b32.xlu0 %v892, 32
  %v895 = vpop.permute.xlu0 %894
  %v897 = vadd.f32 %v886, %v895
  %v898 = vld [vmem:[#allocation2 + $0x6] sm:$0x3]
  %900 = vrot.lane.b32.xlu0 %v897, 64
  %v901 = vpop.permute.xlu0 %900
  %v902 = vsel %vm72, %v901, 0
  %904 = vmatpush.msra.mxu0 0.0
  %905 = vmatpush.msra.mxu0 0.0
  %906 = vmatpush.msra.mxu0 0.0
  %907 = vmatpush.msra.mxu0 0.0
  %908 = vmatpush.msra.mxu0 0.0
  %909 = vmatpush.msra.mxu0 0.0
  %910 = vmatpush.msra.mxu0 0.0
  %911 = vmatpush.msra.mxu0 0.0
  %912 = vmatpush.msra.mxu0 0.0
  %913 = vmatpush.msra.mxu0 0.0
  %914 = vmatpush.msra.mxu0 0.0
  %915 = vmatpush.msra.mxu0 0.0
  %916 = vmatpush.msra.mxu0 %v689
  %917 = vmatpush.msra.mxu0 %v688
  %918 = vmatpush.msra.mxu0 %v687
  %919 = vmatpush.msra.mxu0 %v686
  %920 = vmatmul.f32.gmra.mxu0 %v902
  %v921 = vpop.f32.mrf.mxu0
  %v922 = vadd.f32 0.0, %v921
  %923 = vdwg.mxu0
  %v924 = vadd.f32 %v898, %v922
  %v925 = vxor.u32 %v924, 2147483648
  %v926 = vmul.f32 %v925, 1.442695
  %v927 = vpow.pop %v926
  %v928 = vadd.f32 %v927, 1.0
  %v929 = vrcp.pop %v928
  %v930 = vmul.f32 %v928, %v929
  %v931 = vsub.f32 1.0, %v930
  %v932 = vmul.f32 %v929, %v931
  %v933 = vadd.f32 %v929, %v932
  %vm934 = vweird.f32 %v928
  %vm935 = vweird.f32 %v929
  %vm936 = vmor %vm934, %vm935
  %v937 = vsel %vm936, %v929, %v933
  %v938 = vand.u32 2147483647, %v928
  %vm939 = vcmp.eq.f32.partialorder %v938, 8.507059e+37
  %v940 = vand.u32 %v928, 2147483648
  %v941 = vor.u32 1.1754944e-38, %v940
  %v942 = vsel %vm939, %v941, %v937
  %v943 = vmul.f32 1.0, %v942
  %v944 = vadd.f32 %v922, %v735
  %946 = vrot.lane.b32.xlu0 %v944, 64
  %v947 = vpop.permute.xlu0 %946
  %v949 = vmul.f32 %v943, %v947
  %951 = vrot.lane.b32.xlu0 %v949, 64
  %v952 = vpop.permute.xlu0 %951
  %v954 = vadd.f32 %v898, %v952
  %v955 = vtanh.pop %v954
  %v956 = vsub.f32 %v897, %v955
  %958 = vrot.lane.b32.xlu0 %v956, 96
  %v959 = vpop.permute.xlu0 %958
  %v961 = vmul.f32 %v943, %v959
  %963 = vrot.lane.b32.xlu0 %v961, 32
  %v964 = vpop.permute.xlu0 %963
  %v966 = vadd.f32 %v955, %v964
  %v967 = vld [vmem:[#allocation2 + $0x8] sm:$0x3]
  %969 = vrot.lane.b32.xlu0 %v966, 64
  %v970 = vpop.permute.xlu0 %969
  %v971 = vsel %vm72, %v970, 0
  %973 = vmatpush.msra.mxu0 0.0
  %974 = vmatpush.msra.mxu0 0.0
  %975 = vmatpush.msra.mxu0 0.0
  %976 = vmatpush.msra.mxu0 0.0
  %977 = vmatpush.msra.mxu0 0.0
  %978 = vmatpush.msra.mxu0 0.0
  %979 = vmatpush.msra.mxu0 0.0
  %980 = vmatpush.msra.mxu0 0.0
  %981 = vmatpush.msra.mxu0 0.0
  %982 = vmatpush.msra.mxu0 0.0
  %983 = vmatpush.msra.mxu0 0.0
  %984 = vmatpush.msra.mxu0 0.0
  %985 = vmatpush.msra.mxu0 %v689
  %986 = vmatpush.msra.mxu0 %v688
  %987 = vmatpush.msra.mxu0 %v687
  %988 = vmatpush.msra.mxu0 %v686
  %989 = vmatmul.f32.gmra.mxu0 %v971
  %v990 = vpop.f32.mrf.mxu0
  %v991 = vadd.f32 0.0, %v990
  %992 = vdwg.mxu0
  %v993 = vadd.f32 %v967, %v991
  %v994 = vxor.u32 %v993, 2147483648
  %v995 = vmul.f32 %v994, 1.442695
  %v996 = vpow.pop %v995
  %v997 = vadd.f32 %v996, 1.0
  %v998 = vrcp.pop %v997
  %v999 = vmul.f32 %v997, %v998
  %v1000 = vsub.f32 1.0, %v999
  %v1001 = vmul.f32 %v998, %v1000
  %v1002 = vadd.f32 %v998, %v1001
  %vm1003 = vweird.f32 %v997
  %vm1004 = vweird.f32 %v998
  %vm1005 = vmor %vm1003, %vm1004
  %v1006 = vsel %vm1005, %v998, %v1002
  %v1007 = vand.u32 2147483647, %v997
  %vm1008 = vcmp.eq.f32.partialorder %v1007, 8.507059e+37
  %v1009 = vand.u32 %v997, 2147483648
  %v1010 = vor.u32 1.1754944e-38, %v1009
  %v1011 = vsel %vm1008, %v1010, %v1006
  %v1012 = vmul.f32 1.0, %v1011
  %v1013 = vadd.f32 %v991, %v735
  %1015 = vrot.lane.b32.xlu0 %v1013, 64
  %v1016 = vpop.permute.xlu0 %1015
  %v1018 = vmul.f32 %v1012, %v1016
  %1020 = vrot.lane.b32.xlu0 %v1018, 64
  %v1021 = vpop.permute.xlu0 %1020
  %v1023 = vadd.f32 %v967, %v1021
  %v1024 = vtanh.pop %v1023
  %v1025 = vsub.f32 %v966, %v1024
  %1027 = vrot.lane.b32.xlu0 %v1025, 96
  %v1028 = vpop.permute.xlu0 %1027
  %v1030 = vmul.f32 %v1012, %v1028
  %1032 = vrot.lane.b32.xlu0 %v1030, 32
  %v1033 = vpop.permute.xlu0 %1032
  %v1035 = vadd.f32 %v1024, %v1033
  %v1036 = vld [vmem:[#allocation2 + $0xa] sm:$0x3]
  %1038 = vrot.lane.b32.xlu0 %v1035, 64
  %v1039 = vpop.permute.xlu0 %1038
  %v1040 = vsel %vm72, %v1039, 0
  %1042 = vmatpush.msra.mxu0 0.0
  %1043 = vmatpush.msra.mxu0 0.0
  %1044 = vmatpush.msra.mxu0 0.0
  %1045 = vmatpush.msra.mxu0 0.0
  %1046 = vmatpush.msra.mxu0 0.0
  %1047 = vmatpush.msra.mxu0 0.0
  %1048 = vmatpush.msra.mxu0 0.0
  %1049 = vmatpush.msra.mxu0 0.0
  %1050 = vmatpush.msra.mxu0 0.0
  %1051 = vmatpush.msra.mxu0 0.0
  %1052 = vmatpush.msra.mxu0 0.0
  %1053 = vmatpush.msra.mxu0 0.0
  %1054 = vmatpush.msra.mxu0 %v689
  %1055 = vmatpush.msra.mxu0 %v688
  %1056 = vmatpush.msra.mxu0 %v687
  %1057 = vmatpush.msra.mxu0 %v686
  %1058 = vmatmul.f32.gmra.mxu0 %v1040
  %v1059 = vpop.f32.mrf.mxu0
  %v1060 = vadd.f32 0.0, %v1059
  %1061 = vdwg.mxu0
  %v1062 = vadd.f32 %v1036, %v1060
  %v1063 = vxor.u32 %v1062, 2147483648
  %v1064 = vmul.f32 %v1063, 1.442695
  %v1065 = vpow.pop %v1064
  %v1066 = vadd.f32 %v1065, 1.0
  %v1067 = vrcp.pop %v1066
  %v1068 = vmul.f32 %v1066, %v1067
  %v1069 = vsub.f32 1.0, %v1068
  %v1070 = vmul.f32 %v1067, %v1069
  %v1071 = vadd.f32 %v1067, %v1070
  %vm1072 = vweird.f32 %v1066
  %vm1073 = vweird.f32 %v1067
  %vm1074 = vmor %vm1072, %vm1073
  %v1075 = vsel %vm1074, %v1067, %v1071
  %v1076 = vand.u32 2147483647, %v1066
  %vm1077 = vcmp.eq.f32.partialorder %v1076, 8.507059e+37
  %v1078 = vand.u32 %v1066, 2147483648
  %v1079 = vor.u32 1.1754944e-38, %v1078
  %v1080 = vsel %vm1077, %v1079, %v1075
  %v1081 = vmul.f32 1.0, %v1080
  %v1082 = vadd.f32 %v1060, %v735
  %1084 = vrot.lane.b32.xlu0 %v1082, 64
  %v1085 = vpop.permute.xlu0 %1084
  %v1087 = vmul.f32 %v1081, %v1085
  %1089 = vrot.lane.b32.xlu0 %v1087, 64
  %v1090 = vpop.permute.xlu0 %1089
  %v1092 = vadd.f32 %v1036, %v1090
  %v1093 = vtanh.pop %v1092
  %v1094 = vsub.f32 %v1035, %v1093
  %1096 = vrot.lane.b32.xlu0 %v1094, 96
  %v1097 = vpop.permute.xlu0 %1096
  %v1099 = vmul.f32 %v1081, %v1097
  %1101 = vrot.lane.b32.xlu0 %v1099, 32
  %v1102 = vpop.permute.xlu0 %1101
  %v1104 = vadd.f32 %v1093, %v1102
  %v1105 = vld [vmem:[#allocation2 + $0xc] sm:$0x3]
  %1107 = vrot.lane.b32.xlu0 %v1104, 64
  %v1108 = vpop.permute.xlu0 %1107
  %v1109 = vsel %vm72, %v1108, 0
  %1111 = vmatpush.msra.mxu0 0.0
  %1112 = vmatpush.msra.mxu0 0.0
  %1113 = vmatpush.msra.mxu0 0.0
  %1114 = vmatpush.msra.mxu0 0.0
  %1115 = vmatpush.msra.mxu0 0.0
  %1116 = vmatpush.msra.mxu0 0.0
  %1117 = vmatpush.msra.mxu0 0.0
  %1118 = vmatpush.msra.mxu0 0.0
  %1119 = vmatpush.msra.mxu0 0.0
  %1120 = vmatpush.msra.mxu0 0.0
  %1121 = vmatpush.msra.mxu0 0.0
  %1122 = vmatpush.msra.mxu0 0.0
  %1123 = vmatpush.msra.mxu0 %v689
  %1124 = vmatpush.msra.mxu0 %v688
  %1125 = vmatpush.msra.mxu0 %v687
  %1126 = vmatpush.msra.mxu0 %v686
  %1127 = vmatmul.f32.gmra.mxu0 %v1109
  %v1128 = vpop.f32.mrf.mxu0
  %v1129 = vadd.f32 0.0, %v1128
  %1130 = vdwg.mxu0
  %v1131 = vadd.f32 %v1105, %v1129
  %v1132 = vxor.u32 %v1131, 2147483648
  %v1133 = vmul.f32 %v1132, 1.442695
  %v1134 = vpow.pop %v1133
  %v1135 = vadd.f32 %v1134, 1.0
  %v1136 = vrcp.pop %v1135
  %v1137 = vmul.f32 %v1135, %v1136
  %v1138 = vsub.f32 1.0, %v1137
  %v1139 = vmul.f32 %v1136, %v1138
  %v1140 = vadd.f32 %v1136, %v1139
  %vm1141 = vweird.f32 %v1135
  %vm1142 = vweird.f32 %v1136
  %vm1143 = vmor %vm1141, %vm1142
  %v1144 = vsel %vm1143, %v1136, %v1140
  %v1145 = vand.u32 2147483647, %v1135
  %vm1146 = vcmp.eq.f32.partialorder %v1145, 8.507059e+37
  %v1147 = vand.u32 %v1135, 2147483648
  %v1148 = vor.u32 1.1754944e-38, %v1147
  %v1149 = vsel %vm1146, %v1148, %v1144
  %v1150 = vmul.f32 1.0, %v1149
  %v1151 = vadd.f32 %v1129, %v735
  %1153 = vrot.lane.b32.xlu0 %v1151, 64
  %v1154 = vpop.permute.xlu0 %1153
  %v1156 = vmul.f32 %v1150, %v1154
  %1158 = vrot.lane.b32.xlu0 %v1156, 64
  %v1159 = vpop.permute.xlu0 %1158
  %v1161 = vadd.f32 %v1105, %v1159
  %v1162 = vtanh.pop %v1161
  %v1163 = vsub.f32 %v1104, %v1162
  %1165 = vrot.lane.b32.xlu0 %v1163, 96
  %v1166 = vpop.permute.xlu0 %1165
  %v1168 = vmul.f32 %v1150, %v1166
  %1170 = vrot.lane.b32.xlu0 %v1168, 32
  %v1171 = vpop.permute.xlu0 %1170
  %v1173 = vadd.f32 %v1162, %v1171
  %v1174 = vld [vmem:[#allocation2 + $0xe] sm:$0x3]
  %1176 = vrot.lane.b32.xlu0 %v1173, 64
  %v1177 = vpop.permute.xlu0 %1176
  %v1178 = vsel %vm72, %v1177, 0
  %1180 = vmatpush.msra.mxu0 0.0
  %1181 = vmatpush.msra.mxu0 0.0
  %1182 = vmatpush.msra.mxu0 0.0
  %1183 = vmatpush.msra.mxu0 0.0
  %1184 = vmatpush.msra.mxu0 0.0
  %1185 = vmatpush.msra.mxu0 0.0
  %1186 = vmatpush.msra.mxu0 0.0
  %1187 = vmatpush.msra.mxu0 0.0
  %1188 = vmatpush.msra.mxu0 0.0
  %1189 = vmatpush.msra.mxu0 0.0
  %1190 = vmatpush.msra.mxu0 0.0
  %1191 = vmatpush.msra.mxu0 0.0
  %1192 = vmatpush.msra.mxu0 %v689
  %1193 = vmatpush.msra.mxu0 %v688
  %1194 = vmatpush.msra.mxu0 %v687
  %1195 = vmatpush.msra.mxu0 %v686
  %1196 = vmatmul.f32.gmra.mxu0 %v1178
  %v1197 = vpop.f32.mrf.mxu0
  %v1198 = vadd.f32 0.0, %v1197
  %1199 = vdwg.mxu0
  %v1200 = vadd.f32 %v1174, %v1198
  %v1201 = vxor.u32 %v1200, 2147483648
  %v1202 = vmul.f32 %v1201, 1.442695
  %v1203 = vpow.pop %v1202
  %v1204 = vadd.f32 %v1203, 1.0
  %v1205 = vrcp.pop %v1204
  %v1206 = vmul.f32 %v1204, %v1205
  %v1207 = vsub.f32 1.0, %v1206
  %v1208 = vmul.f32 %v1205, %v1207
  %v1209 = vadd.f32 %v1205, %v1208
  %vm1210 = vweird.f32 %v1204
  %vm1211 = vweird.f32 %v1205
  %vm1212 = vmor %vm1210, %vm1211
  %v1213 = vsel %vm1212, %v1205, %v1209
  %v1214 = vand.u32 2147483647, %v1204
  %vm1215 = vcmp.eq.f32.partialorder %v1214, 8.507059e+37
  %v1216 = vand.u32 %v1204, 2147483648
  %v1217 = vor.u32 1.1754944e-38, %v1216
  %v1218 = vsel %vm1215, %v1217, %v1213
  %v1219 = vmul.f32 1.0, %v1218
  %v1220 = vadd.f32 %v1198, %v735
  %1222 = vrot.lane.b32.xlu0 %v1220, 64
  %v1223 = vpop.permute.xlu0 %1222
  %v1225 = vmul.f32 %v1219, %v1223
  %1227 = vrot.lane.b32.xlu0 %v1225, 64
  %v1228 = vpop.permute.xlu0 %1227
  %v1230 = vadd.f32 %v1174, %v1228
  %v1231 = vtanh.pop %v1230
  %v1232 = vsub.f32 %v1173, %v1231
  %1234 = vrot.lane.b32.xlu0 %v1232, 96
  %v1235 = vpop.permute.xlu0 %1234
  %v1237 = vmul.f32 %v1219, %v1235
  %1239 = vrot.lane.b32.xlu0 %v1237, 32
  %v1240 = vpop.permute.xlu0 %1239
  %v1242 = vadd.f32 %v1231, %v1240
  %v1243 = vld [vmem:[%s9] sm:$0xff]
  %v1244 = vld [vmem:[%s9 + $0x8] sm:$0xff]
  %v1245 = vld [vmem:[%s9 + $0x10] sm:$0xff]
  %v1246 = vld [vmem:[%s9 + $0x18] sm:$0xff]
  %v1247 = vld [vmem:[%s10] sm:$0x1]
  %v1249 = vperm.slane %v1247, 0
  %1252 = vrot.lane.b32.xlu0 %v1242, 64
  %v1253 = vpop.permute.xlu0 %1252
  %v1254 = vsel %vm72, %v1253, 0
  %1256 = vmatpush.msra.mxu0 0.0
  %1257 = vmatpush.msra.mxu0 0.0
  %1258 = vmatpush.msra.mxu0 0.0
  %1259 = vmatpush.msra.mxu0 0.0
  %1260 = vmatpush.msra.mxu0 0.0
  %1261 = vmatpush.msra.mxu0 0.0
  %1262 = vmatpush.msra.mxu0 0.0
  %1263 = vmatpush.msra.mxu0 0.0
  %1264 = vmatpush.msra.mxu0 0.0
  %1265 = vmatpush.msra.mxu0 0.0
  %1266 = vmatpush.msra.mxu0 0.0
  %1267 = vmatpush.msra.mxu0 0.0
  %1268 = vmatpush.msra.mxu0 %v1246
  %1269 = vmatpush.msra.mxu0 %v1245
  %1270 = vmatpush.msra.mxu0 %v1244
  %1271 = vmatpush.msra.mxu0 %v1243
  %1272 = vmatmul.f32.gmra.mxu0 %v1254
  %v1273 = vpop.f32.mrf.mxu0
  %v1274 = vadd.f32 %v1249, %v1273
  %1275 = vdwg.mxu0
  %1276 = vst [vmem:[%s11] sm:$0x3] %v1274
  // Predicated region
  $region46: #{gru_forward.1} parent=0 // pred_check
    _
  $region47: #{gru_forward.1} parent=0 // pred_check_branch
    %1278 = sbr.rel (0) target = $region49
  $region48: #{gru_forward.1} parent=0 // pred_region
    _
  $region49: #{gru_forward.1} parent=0 // pred_fallthru
    _
  // Predicated region
  $region50: #{gru_forward.1} parent=0 // pred_check
    _
  $region51: #{gru_forward.1} parent=0 // pred_check_branch
    %1280 = sbr.rel (0) target = $region53
  $region52: #{gru_forward.1} parent=0 // pred_region
    _
  $region53: #{gru_forward.1} parent=0 // pred_fallthru
    _

</llo_original>
